<compile_context>
chip_gen: v6e
topology: v6e:2x2x1
jax: 0.10.0
libtpu: 0.0.40
codegen_flags: <defaults>
</compile_context>

<pallas_src>
import functools

import jax
import jax.numpy as jnp
import jax.scipy.linalg as jsl
from jax import lax
from jax.experimental import pallas as pl
from jax.experimental.pallas import tpu as pltpu


# ---------------------------------------------------------------------------
# Init-only Pallas kernel: gram matrix  m = a.T @ a + rho * phi.T @ phi
# ---------------------------------------------------------------------------
def gram_kernel(a_ref, phi_ref, m_ref, *, rho):
    a = a_ref[...]                                   # (M, A) f32
    phi = phi_ref[...]                               # (S, A) f32
    ata = lax.dot_general(a, a, (((0,), (0,)), ((), ())),
                          preferred_element_type=jnp.float32)
    ftf = lax.dot_general(phi, phi, (((0,), (0,)), ((), ())),
                          preferred_element_type=jnp.float32)
    m_ref[...] = ata + rho * ftf


# ---------------------------------------------------------------------------
# Fused forward kernel: measurement + x0 + folded ADMM loop + clamp (per tile)
# ---------------------------------------------------------------------------
def dad_forward_kernel(minmax_ref, x_ref, noise_ref, a_ref, phi_ref, d_ref,
                       g_ref, out_ref, *, admm_iterations, rho, lamda):
    x = x_ref[...]                                   # (TB, A) f32
    a = a_ref[...]                                   # (M, A)  matmul dtype
    phi = phi_ref[...]                               # (S, A)  matmul dtype
    d = d_ref[...]                                   # (1, A)  f32, diag(inv(U))
    g = g_ref[...]                                   # (S, S)  rho*(phi*d)@phi.T
    mdt = a.dtype                                    # MXU operand dtype (bf16/f32)

    # y[b,m] = sum_a a[m,a] x[b,a]  (+ measurement noise, added in f32)
    y = lax.dot_general(x.astype(mdt), a, (((1,), (1,)), ((), ())),
                        preferred_element_type=jnp.float32)
    y = y + 1e-4 * noise_ref[...]

    # x0[b,a] = sum_m a[m,a] y[b,m]
    x0 = lax.dot_general(y.astype(mdt), a, (((1,), (0,)), ((), ())),
                         preferred_element_type=jnp.float32)

    # c0[b,s] = sum_a phi[s,a] (d*x0)[b,a]
    c0 = lax.dot_general((d * x0).astype(mdt), phi, (((1,), (1,)), ((), ())),
                         preferred_element_type=jnp.float32)

    TB = x.shape[0]
    S = phi.shape[0]
    thr = lamda / rho
    w = jnp.zeros((TB, S), jnp.float32)              # w = z - u
    u = jnp.zeros((TB, S), jnp.float32)

    def admm_step(w, u):
        fxu = c0 + lax.dot_general(w.astype(mdt), g, (((1,), (0,)), ((), ())),
                                   preferred_element_type=jnp.float32) + u
        # soft threshold: sign(x)*max(0, |x|-thr) == x - clip(x, -thr, thr)
        z = fxu - jnp.clip(fxu, -thr, thr)
        u_new = u + fxu - z
        return z - u_new, u_new

    # N-1 (z,u) updates; the output only needs the LAST iteration's x-update,
    # which reads (z,u) after N-1 updates (the last fxu/z/u are dead code).
    n_updates = admm_iterations - 1
    if n_updates <= 8:                               # small static trip count
        for _ in range(n_updates):
            w, u = admm_step(w, u)
    else:
        # unroll=True keeps the per-iteration VPU shrinkage and the bf16 cast
        # of w visible to the LLO scheduler so they hide under the w@G MXU push.
        w, u = lax.fori_loop(0, n_updates,
                             lambda i, wu: admm_step(*wu), (w, u),
                             unroll=True)

    # Last x-update:  x_hat = d * (x0 + rho * (z - u) @ phi)
    t = lax.dot_general(w.astype(mdt), phi, (((1,), (0,)), ((), ())),
                        preferred_element_type=jnp.float32)
    x_hat = d * (x0 + rho * t)

    mn = minmax_ref[0]                               # SMEM scalars
    mx = minmax_ref[1]
    out_ref[...] = jnp.clip(x_hat, mn, mx)


# ---------------------------------------------------------------------------
# Tile-size / device helpers
# ---------------------------------------------------------------------------
def _round_up(n, m):
    return ((n + m - 1) // m) * m


def _tpu_defaults():
    """(default batch tile, prefer >=2 grid tiles) from the attached TPU kind."""
    try:
        kind = jax.devices()[0].device_kind.lower()
    except Exception:
        kind = ""
    is_v7 = "7" in kind                               # v7x: 2 TensorCores/chip
    is_old = any(t in kind for t in ("v2", "v3", "v4", "v5"))
    # v5e MXU is 4x128^2 -> 128 result rows already fill it; v6e/v7x are 2x256^2.
    return (128 if is_old else 256), is_v7


def _pick_batch_tile(batch, desired, prefer_two_tiles):
    tb = min(int(desired), _round_up(batch, 8))
    if prefer_two_tiles and batch > 8:
        # v7x: guarantee >=2 batch tiles so the "parallel" grid axis actually
        # shards across both TensorCores.
        half = max(8, _round_up(-(-batch // 2), 8))
        tb = min(tb, half)
    return max(8, _round_up(tb, 8))


# ---------------------------------------------------------------------------
# Jitted forward glue around the fused kernel
# ---------------------------------------------------------------------------
def _dad_forward(x2, noise, a, phi, d, g, *, admm_iterations, rho, lamda,
                 batch_tile, prefer_two_tiles):
    B, A = x2.shape
    M = a.shape[0]
    S = phi.shape[0]

    # Global min/max of x (cheap glue reduction), passed as SMEM scalars.
    minmax = jnp.stack([jnp.min(x2), jnp.max(x2)]).astype(jnp.float32)

    # Batch tiling: multiple of 8 sublanes; no explicit padding — the grid is
    # ragged and Pallas masks the partial last tile (rows are independent, so
    # garbage tail rows never contaminate valid output rows).
    tb = _pick_batch_tile(B, batch_tile, prefer_two_tiles)
    grid = (pl.cdiv(B, tb),)

    # TODO(synk): for very large ambient (phi/G no longer fitting v7x's 64 MiB
    # VMEM) the phi/G operands would need K-tiled BlockSpecs and single
    # buffering (pipeline_mode=pl.Buffered(1)) on the grid-invariant blocks; at
    # these shapes the full-operand bf16 blocks are ~1 MiB and fit everywhere.
    out = pl.pallas_call(
        functools.partial(dad_forward_kernel,
                          admm_iterations=admm_iterations,
                          rho=rho, lamda=lamda),
        out_shape=jax.ShapeDtypeStruct((B, A), jnp.float32),
        grid=grid,
        in_specs=[
            pl.BlockSpec(memory_space=pltpu.MemorySpace.SMEM),   # minmax (2,)
            pl.BlockSpec((tb, A), lambda i: (i, 0)),             # x tile
            pl.BlockSpec((tb, M), lambda i: (i, 0)),             # noise tile
            pl.BlockSpec((M, A), lambda i: (0, 0)),              # a
            pl.BlockSpec((S, A), lambda i: (0, 0)),              # phi
            pl.BlockSpec((1, A), lambda i: (0, 0)),              # d
            pl.BlockSpec((S, S), lambda i: (0, 0)),              # G
        ],
        out_specs=pl.BlockSpec((tb, A), lambda i: (i, 0)),
        compiler_params=pltpu.CompilerParams(
            dimension_semantics=("parallel",)),
    )(minmax, x2, noise, a, phi, d, g)
    return out


# ---------------------------------------------------------------------------
# Python wrapper mirroring the PyTorch DAD module
# ---------------------------------------------------------------------------
class DADPallas:
    def __init__(self, measurements, ambient, redundancy_multiplier,
                 admm_iterations, lamda, rho, key,
                 batch_tile=None, matmul_dtype=jnp.bfloat16):
        assert admm_iterations >= 1
        self.measurements = measurements
        self.ambient = ambient
        self.redundancy_multiplier = redundancy_multiplier
        self.admm_iterations = int(admm_iterations)
        self.lamda = float(lamda)
        self.rho = float(rho)
        self.S = ambient * redundancy_multiplier

        default_tile, prefer_two_tiles = _tpu_defaults()
        if batch_tile is None:
            batch_tile = default_tile

        k_a, k_phi = jax.random.split(key)
        # a = randn(M, A) / sqrt(M)   (normalize == 'sqrt_m')
        self.a = (jax.random.normal(k_a, (measurements, ambient), jnp.float32)
                  / jnp.sqrt(jnp.float32(measurements)))
        # phi = kaiming_normal_(empty(S, A)): std = sqrt(2 / fan_in), fan_in = A
        self.phi = (jax.random.normal(k_phi, (self.S, ambient), jnp.float32)
                    * jnp.sqrt(jnp.float32(2.0 / ambient)))

        # ---- parameter-only precompute, hoisted out of the forward pass ----
        m = pl.pallas_call(
            functools.partial(gram_kernel, rho=self.rho),
            out_shape=jax.ShapeDtypeStruct((ambient, ambient), jnp.float32),
            in_specs=[pl.BlockSpec(memory_space=pltpu.MemorySpace.VMEM)] * 2,
            out_specs=pl.BlockSpec(memory_space=pltpu.MemorySpace.VMEM),
        )(self.a, self.phi)

        # TODO(synk): pivoted LU factorization has no clean Pallas form; it is
        # init-only so it stays in glue JAX.
        _, L, U = jsl.lu(m)
        diag_u = jnp.diag(U)
        assert bool(jnp.all(jnp.abs(diag_u) > 0.0)), "singular gram matrix"
        # L is unit-lower-triangular -> diag(inv(L)) == 1 (that einsum is a
        # no-op); only diag(inv(U)) = 1/diag(U) is needed.
        self.d = (1.0 / diag_u).reshape(1, ambient).astype(jnp.float32)

        # Folded ADMM iteration matrix (init-only glue):
        #   fxu = c0 + (z-u) @ G + u,  G = rho * (phi * d) @ phi.T
        g = self.rho * jnp.dot(self.phi * self.d, self.phi.T,
                               precision=lax.Precision.HIGHEST)

        # MXU-operand storage: bf16 by default (f32 accumulation in-kernel);
        # pass matmul_dtype=jnp.float32 to reproduce the reference bit pattern
        # more closely at ~3-4x lower MXU throughput.
        self.a_mm = self.a.astype(matmul_dtype)
        self.phi_mm = self.phi.astype(matmul_dtype)
        self.g_mm = g.astype(matmul_dtype)

        self._fwd = jax.jit(functools.partial(
            _dad_forward, admm_iterations=self.admm_iterations,
            rho=self.rho, lamda=self.lamda, batch_tile=int(batch_tile),
            prefer_two_tiles=bool(prefer_two_tiles)))

    def __call__(self, x, noise_key):
        B = x.shape[0]
        x2 = x.reshape(B, -1).astype(jnp.float32)          # x.view(B, -1)
        noise = jax.random.normal(noise_key, (B, self.measurements),
                                  jnp.float32)
        return self._fwd(x2, noise, self.a_mm, self.phi_mm, self.d, self.g_mm)


# ---------------------------------------------------------------------------
# Pure-JAX literal transcription of the PyTorch forward (for a sanity check)
# ---------------------------------------------------------------------------
def _reference_forward(x, noise, a, phi, admm_iterations, lamda, rho):
    hp = lax.Precision.HIGHEST
    B = x.shape[0]
    x2 = x.reshape(B, -1).astype(jnp.float32)
    mn, mx = jnp.min(x2), jnp.max(x2)
    y = jnp.einsum('ma,ba->bm', a, x2, precision=hp) + 1e-4 * noise
    m = jnp.dot(a.T, a, precision=hp) + rho * jnp.dot(phi.T, phi, precision=hp)
    _, L, U = jsl.lu(m)
    dL = jnp.diag(jnp.linalg.inv(L))
    dU = jnp.diag(jnp.linalg.inv(U))
    x0 = jnp.einsum('am,bm->ba', a.T, y, precision=hp)
    S = phi.shape[0]
    u = jnp.zeros((B, S), jnp.float32)
    z = jnp.zeros((B, S), jnp.float32)
    thr = lamda / rho
    x_hat = x0
    for _ in range(admm_iterations):
        t = jnp.einsum('as,bs->ba', rho * phi.T, z - u, precision=hp)
        x_hat = dU[None, :] * (dL[None, :] * (x0 + t))
        fxu = jnp.einsum('sa,ba->bs', phi, x_hat, precision=hp) + u
        z = jnp.sign(fxu) * jnp.maximum(jnp.zeros_like(fxu), jnp.abs(fxu) - thr)
        u = u + fxu - z
    return jnp.clip(x_hat, mn, mx)


if __name__ == "__main__":
    # Small shapes consistent with the module: NCHW images flattened to ambient.
    B, C, H, W = 8, 1, 16, 16
    ambient = C * H * W                  # 256
    measurements = 64                    # measurement_factor = 0.25
    redundancy = 2
    layers = 3
    lamda = 1e-4
    rho = 1.0

    key = jax.random.PRNGKey(0)
    k_param, k_x, k_noise = jax.random.split(key, 3)

    model = DADPallas(measurements=measurements, ambient=ambient,
                      redundancy_multiplier=redundancy,
                      admm_iterations=layers, lamda=lamda, rho=rho,
                      key=k_param)

    x = jax.random.normal(k_x, (B, C, H, W), jnp.float32)   # NCHW input
    noise = jax.random.normal(k_noise, (B, measurements), jnp.float32)

    out = jax.block_until_ready(model(x, k_noise))
    assert out.shape == (B, ambient) and out.dtype == jnp.float32

    # Loose numerical sanity check against the literal (unfolded) f32 reference
    # (the Pallas kernel uses bf16 MXU operands with f32 accumulation).
    ref = jax.block_until_ready(
        _reference_forward(x, noise, model.a, model.phi, layers, lamda, rho))
    err = float(jnp.max(jnp.abs(out - ref)))
    scale = float(1.0 + jnp.max(jnp.abs(ref)))
    assert err < 5e-2 * scale, f"mismatch: max abs err {err} (scale {scale})"

    print("KERNEL_OK")
</pallas_src>

<mosaic_0001>
module attributes {stable_mosaic.version = 11 : i64} {
  func.func @gram_kernel(%arg0: memref<64x256xf32, #tpu.memory_space<vmem>>, %arg1: memref<512x256xf32, #tpu.memory_space<vmem>>, %arg2: memref<256x256xf32, #tpu.memory_space<vmem>>) attributes {dimension_semantics = [], scalar_prefetch = 0 : i64, scratch_operands = 0 : i64, tpu.core_type = #tpu.core_type<tc>} {
    %c0 = arith.constant 0 : index
    %c0_0 = arith.constant 0 : index
    %0 = vector.load %arg0[%c0, %c0_0] : memref<64x256xf32, #tpu.memory_space<vmem>>, vector<64x256xf32>
    %c0_1 = arith.constant 0 : index
    %c0_2 = arith.constant 0 : index
    %1 = vector.load %arg1[%c0_1, %c0_2] : memref<512x256xf32, #tpu.memory_space<vmem>>, vector<512x256xf32>
    %cst = arith.constant dense<0.000000e+00> : vector<256x256xf32>
    %2 = tpu.matmul %0, %0, %cst {dimension_numbers = #tpu.dot_dimension_numbers<[0], [0], [1], [1], [0, 1, 1, 1], [], []>} : vector<64x256xf32>, vector<64x256xf32>, vector<256x256xf32> -> vector<256x256xf32>
    %cst_3 = arith.constant dense<0.000000e+00> : vector<256x256xf32>
    %3 = tpu.matmul %1, %1, %cst_3 {dimension_numbers = #tpu.dot_dimension_numbers<[0], [0], [1], [1], [0, 1, 1, 1], [], []>} : vector<512x256xf32>, vector<512x256xf32>, vector<256x256xf32> -> vector<256x256xf32>
    %cst_4 = arith.constant 1.000000e+00 : f32
    %4 = vector.broadcast %cst_4 : f32 to vector<256x256xf32>
    %5 = arith.mulf %4, %3 : vector<256x256xf32>
    %6 = arith.addf %2, %5 : vector<256x256xf32>
    %c0_5 = arith.constant 0 : index
    %c0_6 = arith.constant 0 : index
    %7 = vector.load %arg2[%c0_5, %c0_6] : memref<256x256xf32, #tpu.memory_space<vmem>>, vector<256x256xf32>
    tpu.vector_store %arg2[%c0_5, %c0_6], %6 {strides = array<i32>} : memref<256x256xf32, #tpu.memory_space<vmem>>, vector<256x256xf32>,
    return
  }
}

</mosaic_0001>

<llo_original>
// kernel: tpu_custom_call.1
$region0: #{tpu_custom_call.1}
  #allocation0 [shape = 'u32[]', space=smem, size = 0x4, offset = 0x4, fixed_abs, tag = 'smem constant byte address 0x4 - core index']
  #allocation1 [shape = 'u32[144,128]{1,0:T(1,128)}', space=vmem, size = 0x12000, scoped, tag = 'internal scratch']
  %s0 = inlined_call_operand.hbm [shape: f32[64,256], index: 0, kind: input, shape index: {}]
  %s1 = inlined_call_operand.hbm [shape: f32[512,256], index: 1, kind: input, shape index: {}]
  %s2 = inlined_call_operand.hbm [shape: f32[256,256], index: 2, kind: output, shape index: {}]
  %s3 = sld [smem:[#allocation0]]
  $region26: #{tpu_custom_call.1} parent=0
    _
  %s5 = ssub.s32 1, %s3
  %s6 = scalar_select 0, %s5, %s3
  $region1: #{tpu_custom_call.1} parent=0
    #allocation2 [shape = 'u8[65536]{0}', space=vmem, size = 0x10000, scoped, tag = 'input window, operand 0, single buffered']
    #allocation3 [shape = 's32[1]{0}', space=sflag, size = 0x4, scoped, tag = 'scoped memory for tpu_custom_call.1']
    #allocation4 [shape = 's32[1]{0}', space=sflag, size = 0x4, scoped, tag = 'scoped memory for tpu_custom_call.1']
    #allocation5 [shape = 'u8[524288]{0}', space=vmem, size = 0x80000, scoped, tag = 'input window, operand 1, single buffered']
    #allocation6 [shape = 's32[1]{0}', space=sflag, size = 0x4, scoped, tag = 'scoped memory for tpu_custom_call.1']
    #allocation7 [shape = 'u8[262144]{0}', space=vmem, size = 0x40000, scoped, tag = 'output window, operand 0, single buffered']
    %7 = vsyncpa [#allocation3], 0
    %8 = vsyncpa [#allocation6], 0
    %9 = vsyncpa [#allocation4], 0
    // Predicated region
    $region2: #{tpu_custom_call.1} parent=1 // pred_check
      _
    $region3: #{tpu_custom_call.1} parent=1 // pred_check_branch
      %11 = sbr.rel (0) target = $region5
    $region4: #{tpu_custom_call.1} parent=1 // pred_region
      %s13 = ssub.s32 2048, 2048
      %14 = vsyncadd [#allocation3], %s13
      %s15 = sshll.u32 [#allocation2], 4
      %s16 = int_to_ptr.vmem [resolvable:$true] %s15
      %21 = dma.hbm_to_vmem [thread:$0]  %s0, 2048, %s16, [#allocation3], 256, 256, 16
    $region5: #{tpu_custom_call.1} parent=1 // pred_fallthru
      _
    // Predicated region
    $region6: #{tpu_custom_call.1} parent=1 // pred_check
      _
    $region7: #{tpu_custom_call.1} parent=1 // pred_check_branch
      %23 = sbr.rel (0) target = $region9
    $region8: #{tpu_custom_call.1} parent=1 // pred_region
      %s25 = ssub.s32 16384, 16384
      %26 = vsyncadd [#allocation6], %s25
      %s27 = sshll.u32 [#allocation5], 4
      %s28 = int_to_ptr.vmem [resolvable:$true] %s27
      %33 = dma.hbm_to_vmem [thread:$0]  %s1, 16384, %s28, [#allocation6], 256, 256, 16
    $region9: #{tpu_custom_call.1} parent=1 // pred_fallthru
      _
    // Predicated region
    $region10: #{tpu_custom_call.1} parent=1 // pred_check
      _
    $region11: #{tpu_custom_call.1} parent=1 // pred_check_branch
      %35 = sbr.rel (0) target = $region13
    $region12: #{tpu_custom_call.1} parent=1 // pred_region
      %36 = dma.done [#allocation3], 2048
    $region13: #{tpu_custom_call.1} parent=1 // pred_fallthru
      _
    // Predicated region
    $region14: #{tpu_custom_call.1} parent=1 // pred_check
      _
    $region15: #{tpu_custom_call.1} parent=1 // pred_check_branch
      %38 = sbr.rel (0) target = $region17
    $region16: #{tpu_custom_call.1} parent=1 // pred_region
      %39 = dma.done [#allocation6], 16384
    $region17: #{tpu_custom_call.1} parent=1 // pred_fallthru
      _
    %v40 = vld [vmem:[#allocation2] sm:$0xff]
    %v41 = vld [vmem:[#allocation2 + $0x8] sm:$0xff]
    %v42 = vld [vmem:[#allocation2 + $0x10] sm:$0xff]
    %v43 = vld [vmem:[#allocation2 + $0x18] sm:$0xff]
    %v44 = vld [vmem:[#allocation2 + $0x20] sm:$0xff]
    %v45 = vld [vmem:[#allocation2 + $0x28] sm:$0xff]
    %v46 = vld [vmem:[#allocation2 + $0x30] sm:$0xff]
    %v47 = vld [vmem:[#allocation2 + $0x38] sm:$0xff]
    %v48 = vld [vmem:[#allocation2 + $0x40] sm:$0xff]
    %v49 = vld [vmem:[#allocation2 + $0x48] sm:$0xff]
    %v50 = vld [vmem:[#allocation2 + $0x50] sm:$0xff]
    %v51 = vld [vmem:[#allocation2 + $0x58] sm:$0xff]
    %v52 = vld [vmem:[#allocation2 + $0x60] sm:$0xff]
    %v53 = vld [vmem:[#allocation2 + $0x68] sm:$0xff]
    %v54 = vld [vmem:[#allocation2 + $0x70] sm:$0xff]
    %v55 = vld [vmem:[#allocation2 + $0x78] sm:$0xff]
    %v56 = vld [vmem:[#allocation5] sm:$0xff]
    %v57 = vld [vmem:[#allocation5 + $0x8] sm:$0xff]
    %v58 = vld [vmem:[#allocation5 + $0x10] sm:$0xff]
    %v59 = vld [vmem:[#allocation5 + $0x18] sm:$0xff]
    %v60 = vld [vmem:[#allocation5 + $0x20] sm:$0xff]
    %v61 = vld [vmem:[#allocation5 + $0x28] sm:$0xff]
    %v62 = vld [vmem:[#allocation5 + $0x30] sm:$0xff]
    %v63 = vld [vmem:[#allocation5 + $0x38] sm:$0xff]
    %v64 = vld [vmem:[#allocation5 + $0x40] sm:$0xff]
    %v65 = vld [vmem:[#allocation5 + $0x48] sm:$0xff]
    %v66 = vld [vmem:[#allocation5 + $0x50] sm:$0xff]
    %v67 = vld [vmem:[#allocation5 + $0x58] sm:$0xff]
    %v68 = vld [vmem:[#allocation5 + $0x60] sm:$0xff]
    %v69 = vld [vmem:[#allocation5 + $0x68] sm:$0xff]
    %v70 = vld [vmem:[#allocation5 + $0x70] sm:$0xff]
    %v71 = vld [vmem:[#allocation5 + $0x78] sm:$0xff]
    %v72 = vld [vmem:[#allocation5 + $0x80] sm:$0xff]
    %v73 = vld [vmem:[#allocation5 + $0x88] sm:$0xff]
    %v74 = vld [vmem:[#allocation5 + $0x90] sm:$0xff]
    %v75 = vld [vmem:[#allocation5 + $0x98] sm:$0xff]
    %v76 = vld [vmem:[#allocation5 + $0xa0] sm:$0xff]
    %v77 = vld [vmem:[#allocation5 + $0xa8] sm:$0xff]
    %v78 = vld [vmem:[#allocation5 + $0xb0] sm:$0xff]
    %v79 = vld [vmem:[#allocation5 + $0xb8] sm:$0xff]
    %v80 = vld [vmem:[#allocation5 + $0xc0] sm:$0xff]
    %v81 = vld [vmem:[#allocation5 + $0xc8] sm:$0xff]
    %v82 = vld [vmem:[#allocation5 + $0xd0] sm:$0xff]
    %v83 = vld [vmem:[#allocation5 + $0xd8] sm:$0xff]
    %v84 = vld [vmem:[#allocation5 + $0xe0] sm:$0xff]
    %v85 = vld [vmem:[#allocation5 + $0xe8] sm:$0xff]
    %v86 = vld [vmem:[#allocation5 + $0xf0] sm:$0xff]
    %v87 = vld [vmem:[#allocation5 + $0xf8] sm:$0xff]
    %v88 = vld [vmem:[#allocation5 + $0x100] sm:$0xff]
    %v89 = vld [vmem:[#allocation5 + $0x108] sm:$0xff]
    %v90 = vld [vmem:[#allocation5 + $0x110] sm:$0xff]
    %v91 = vld [vmem:[#allocation5 + $0x118] sm:$0xff]
    %v92 = vld [vmem:[#allocation5 + $0x120] sm:$0xff]
    %v93 = vld [vmem:[#allocation5 + $0x128] sm:$0xff]
    %v94 = vld [vmem:[#allocation5 + $0x130] sm:$0xff]
    %v95 = vld [vmem:[#allocation5 + $0x138] sm:$0xff]
    %v96 = vld [vmem:[#allocation5 + $0x140] sm:$0xff]
    %v97 = vld [vmem:[#allocation5 + $0x148] sm:$0xff]
    %v98 = vld [vmem:[#allocation5 + $0x150] sm:$0xff]
    %v99 = vld [vmem:[#allocation5 + $0x158] sm:$0xff]
    %v100 = vld [vmem:[#allocation5 + $0x160] sm:$0xff]
    %v101 = vld [vmem:[#allocation5 + $0x168] sm:$0xff]
    %v102 = vld [vmem:[#allocation5 + $0x170] sm:$0xff]
    %v103 = vld [vmem:[#allocation5 + $0x178] sm:$0xff]
    %v104 = vld [vmem:[#allocation5 + $0x180] sm:$0xff]
    %v105 = vld [vmem:[#allocation5 + $0x188] sm:$0xff]
    %v106 = vld [vmem:[#allocation5 + $0x190] sm:$0xff]
    %v107 = vld [vmem:[#allocation5 + $0x198] sm:$0xff]
    %v108 = vld [vmem:[#allocation5 + $0x1a0] sm:$0xff]
    %v109 = vld [vmem:[#allocation5 + $0x1a8] sm:$0xff]
    %v110 = vld [vmem:[#allocation5 + $0x1b0] sm:$0xff]
    %v111 = vld [vmem:[#allocation5 + $0x1b8] sm:$0xff]
    %v112 = vld [vmem:[#allocation5 + $0x1c0] sm:$0xff]
    %v113 = vld [vmem:[#allocation5 + $0x1c8] sm:$0xff]
    %v114 = vld [vmem:[#allocation5 + $0x1d0] sm:$0xff]
    %v115 = vld [vmem:[#allocation5 + $0x1d8] sm:$0xff]
    %v116 = vld [vmem:[#allocation5 + $0x1e0] sm:$0xff]
    %v117 = vld [vmem:[#allocation5 + $0x1e8] sm:$0xff]
    %v118 = vld [vmem:[#allocation5 + $0x1f0] sm:$0xff]
    %v119 = vld [vmem:[#allocation5 + $0x1f8] sm:$0xff]
    %v120 = vld [vmem:[#allocation5 + $0x200] sm:$0xff]
    %v121 = vld [vmem:[#allocation5 + $0x208] sm:$0xff]
    %v122 = vld [vmem:[#allocation5 + $0x210] sm:$0xff]
    %v123 = vld [vmem:[#allocation5 + $0x218] sm:$0xff]
    %v124 = vld [vmem:[#allocation5 + $0x220] sm:$0xff]
    %v125 = vld [vmem:[#allocation5 + $0x228] sm:$0xff]
    %v126 = vld [vmem:[#allocation5 + $0x230] sm:$0xff]
    %v127 = vld [vmem:[#allocation5 + $0x238] sm:$0xff]
    %v128 = vld [vmem:[#allocation5 + $0x240] sm:$0xff]
    %v129 = vld [vmem:[#allocation5 + $0x248] sm:$0xff]
    %v130 = vld [vmem:[#allocation5 + $0x250] sm:$0xff]
    %v131 = vld [vmem:[#allocation5 + $0x258] sm:$0xff]
    %v132 = vld [vmem:[#allocation5 + $0x260] sm:$0xff]
    %v133 = vld [vmem:[#allocation5 + $0x268] sm:$0xff]
    %v134 = vld [vmem:[#allocation5 + $0x270] sm:$0xff]
    %v135 = vld [vmem:[#allocation5 + $0x278] sm:$0xff]
    %v136 = vld [vmem:[#allocation5 + $0x280] sm:$0xff]
    %v137 = vld [vmem:[#allocation5 + $0x288] sm:$0xff]
    %v138 = vld [vmem:[#allocation5 + $0x290] sm:$0xff]
    %v139 = vld [vmem:[#allocation5 + $0x298] sm:$0xff]
    %v140 = vld [vmem:[#allocation5 + $0x2a0] sm:$0xff]
    %v141 = vld [vmem:[#allocation5 + $0x2a8] sm:$0xff]
    %v142 = vld [vmem:[#allocation5 + $0x2b0] sm:$0xff]
    %v143 = vld [vmem:[#allocation5 + $0x2b8] sm:$0xff]
    %v144 = vld [vmem:[#allocation5 + $0x2c0] sm:$0xff]
    %v145 = vld [vmem:[#allocation5 + $0x2c8] sm:$0xff]
    %v146 = vld [vmem:[#allocation5 + $0x2d0] sm:$0xff]
    %v147 = vld [vmem:[#allocation5 + $0x2d8] sm:$0xff]
    %v148 = vld [vmem:[#allocation5 + $0x2e0] sm:$0xff]
    %v149 = vld [vmem:[#allocation5 + $0x2e8] sm:$0xff]
    %v150 = vld [vmem:[#allocation5 + $0x2f0] sm:$0xff]
    %v151 = vld [vmem:[#allocation5 + $0x2f8] sm:$0xff]
    %v152 = vld [vmem:[#allocation5 + $0x300] sm:$0xff]
    %v153 = vld [vmem:[#allocation5 + $0x308] sm:$0xff]
    %v154 = vld [vmem:[#allocation5 + $0x310] sm:$0xff]
    %v155 = vld [vmem:[#allocation5 + $0x318] sm:$0xff]
    %v156 = vld [vmem:[#allocation5 + $0x320] sm:$0xff]
    %v157 = vld [vmem:[#allocation5 + $0x328] sm:$0xff]
    %v158 = vld [vmem:[#allocation5 + $0x330] sm:$0xff]
    %v159 = vld [vmem:[#allocation5 + $0x338] sm:$0xff]
    %v160 = vld [vmem:[#allocation5 + $0x340] sm:$0xff]
    %v161 = vld [vmem:[#allocation5 + $0x348] sm:$0xff]
    %v162 = vld [vmem:[#allocation5 + $0x350] sm:$0xff]
    %v163 = vld [vmem:[#allocation5 + $0x358] sm:$0xff]
    %v164 = vld [vmem:[#allocation5 + $0x360] sm:$0xff]
    %v165 = vld [vmem:[#allocation5 + $0x368] sm:$0xff]
    %v166 = vld [vmem:[#allocation5 + $0x370] sm:$0xff]
    %v167 = vld [vmem:[#allocation5 + $0x378] sm:$0xff]
    %v168 = vld [vmem:[#allocation5 + $0x380] sm:$0xff]
    %v169 = vld [vmem:[#allocation5 + $0x388] sm:$0xff]
    %v170 = vld [vmem:[#allocation5 + $0x390] sm:$0xff]
    %v171 = vld [vmem:[#allocation5 + $0x398] sm:$0xff]
    %v172 = vld [vmem:[#allocation5 + $0x3a0] sm:$0xff]
    %v173 = vld [vmem:[#allocation5 + $0x3a8] sm:$0xff]
    %v174 = vld [vmem:[#allocation5 + $0x3b0] sm:$0xff]
    %v175 = vld [vmem:[#allocation5 + $0x3b8] sm:$0xff]
    %v176 = vld [vmem:[#allocation5 + $0x3c0] sm:$0xff]
    %v177 = vld [vmem:[#allocation5 + $0x3c8] sm:$0xff]
    %v178 = vld [vmem:[#allocation5 + $0x3d0] sm:$0xff]
    %v179 = vld [vmem:[#allocation5 + $0x3d8] sm:$0xff]
    %v180 = vld [vmem:[#allocation5 + $0x3e0] sm:$0xff]
    %v181 = vld [vmem:[#allocation5 + $0x3e8] sm:$0xff]
    %v182 = vld [vmem:[#allocation5 + $0x3f0] sm:$0xff]
    %v183 = vld [vmem:[#allocation5 + $0x3f8] sm:$0xff]
    %184 = vxpose.xlu0.b32.start [1/16] %v56, 128
    %185 = vxpose.xlu0.b32.cont [2/16] %v58, 128
    %186 = vxpose.xlu0.b32.cont [3/16] %v60, 128
    %187 = vxpose.xlu0.b32.cont [4/16] %v62, 128
    %188 = vxpose.xlu0.b32.cont [5/16] %v64, 128
    %189 = vxpose.xlu0.b32.cont [6/16] %v66, 128
    %190 = vxpose.xlu0.b32.cont [7/16] %v68, 128
    %191 = vxpose.xlu0.b32.cont [8/16] %v70, 128
    %192 = vxpose.xlu0.b32.cont [9/16] %v72, 128
    %193 = vxpose.xlu0.b32.cont [10/16] %v74, 128
    %194 = vxpose.xlu0.b32.cont [11/16] %v76, 128
    %195 = vxpose.xlu0.b32.cont [12/16] %v78, 128
    %196 = vxpose.xlu0.b32.cont [13/16] %v80, 128
    %197 = vxpose.xlu0.b32.cont [14/16] %v82, 128
    %198 = vxpose.xlu0.b32.cont [15/16] %v84, 128
    %199 = vxpose.xlu0.b32.end [16/16] %v86, 128
    %v200 = vpop.trf.xlu0
    %v201 = vpop.trf.xlu0
    %v202 = vpop.trf.xlu0
    %v203 = vpop.trf.xlu0
    %v204 = vpop.trf.xlu0
    %v205 = vpop.trf.xlu0
    %v206 = vpop.trf.xlu0
    %v207 = vpop.trf.xlu0
    %v208 = vpop.trf.xlu0
    %v209 = vpop.trf.xlu0
    %v210 = vpop.trf.xlu0
    %v211 = vpop.trf.xlu0
    %v212 = vpop.trf.xlu0
    %v213 = vpop.trf.xlu0
    %v214 = vpop.trf.xlu0
    %v215 = vpop.trf.xlu0
    %216 = vxpose.xlu0.b32.start [1/16] %v57, 128
    %217 = vxpose.xlu0.b32.cont [2/16] %v59, 128
    %218 = vxpose.xlu0.b32.cont [3/16] %v61, 128
    %219 = vxpose.xlu0.b32.cont [4/16] %v63, 128
    %220 = vxpose.xlu0.b32.cont [5/16] %v65, 128
    %221 = vxpose.xlu0.b32.cont [6/16] %v67, 128
    %222 = vxpose.xlu0.b32.cont [7/16] %v69, 128
    %223 = vxpose.xlu0.b32.cont [8/16] %v71, 128
    %224 = vxpose.xlu0.b32.cont [9/16] %v73, 128
    %225 = vxpose.xlu0.b32.cont [10/16] %v75, 128
    %226 = vxpose.xlu0.b32.cont [11/16] %v77, 128
    %227 = vxpose.xlu0.b32.cont [12/16] %v79, 128
    %228 = vxpose.xlu0.b32.cont [13/16] %v81, 128
    %229 = vxpose.xlu0.b32.cont [14/16] %v83, 128
    %230 = vxpose.xlu0.b32.cont [15/16] %v85, 128
    %231 = vxpose.xlu0.b32.end [16/16] %v87, 128
    %v232 = vpop.trf.xlu0
    %v233 = vpop.trf.xlu0
    %v234 = vpop.trf.xlu0
    %v235 = vpop.trf.xlu0
    %v236 = vpop.trf.xlu0
    %v237 = vpop.trf.xlu0
    %v238 = vpop.trf.xlu0
    %v239 = vpop.trf.xlu0
    %v240 = vpop.trf.xlu0
    %v241 = vpop.trf.xlu0
    %v242 = vpop.trf.xlu0
    %v243 = vpop.trf.xlu0
    %v244 = vpop.trf.xlu0
    %v245 = vpop.trf.xlu0
    %v246 = vpop.trf.xlu0
    %v247 = vpop.trf.xlu0
    %248 = vxpose.xlu0.b32.start [1/16] %v88, 128
    %249 = vxpose.xlu0.b32.cont [2/16] %v90, 128
    %250 = vxpose.xlu0.b32.cont [3/16] %v92, 128
    %251 = vxpose.xlu0.b32.cont [4/16] %v94, 128
    %252 = vxpose.xlu0.b32.cont [5/16] %v96, 128
    %253 = vxpose.xlu0.b32.cont [6/16] %v98, 128
    %254 = vxpose.xlu0.b32.cont [7/16] %v100, 128
    %255 = vxpose.xlu0.b32.cont [8/16] %v102, 128
    %256 = vxpose.xlu0.b32.cont [9/16] %v104, 128
    %257 = vxpose.xlu0.b32.cont [10/16] %v106, 128
    %258 = vxpose.xlu0.b32.cont [11/16] %v108, 128
    %259 = vxpose.xlu0.b32.cont [12/16] %v110, 128
    %260 = vxpose.xlu0.b32.cont [13/16] %v112, 128
    %261 = vxpose.xlu0.b32.cont [14/16] %v114, 128
    %262 = vxpose.xlu0.b32.cont [15/16] %v116, 128
    %263 = vxpose.xlu0.b32.end [16/16] %v118, 128
    %v264 = vpop.trf.xlu0
    %v265 = vpop.trf.xlu0
    %v266 = vpop.trf.xlu0
    %v267 = vpop.trf.xlu0
    %v268 = vpop.trf.xlu0
    %v269 = vpop.trf.xlu0
    %v270 = vpop.trf.xlu0
    %v271 = vpop.trf.xlu0
    %v272 = vpop.trf.xlu0
    %v273 = vpop.trf.xlu0
    %v274 = vpop.trf.xlu0
    %v275 = vpop.trf.xlu0
    %v276 = vpop.trf.xlu0
    %v277 = vpop.trf.xlu0
    %v278 = vpop.trf.xlu0
    %v279 = vpop.trf.xlu0
    %280 = vxpose.xlu0.b32.start [1/16] %v89, 128
    %281 = vxpose.xlu0.b32.cont [2/16] %v91, 128
    %282 = vxpose.xlu0.b32.cont [3/16] %v93, 128
    %283 = vxpose.xlu0.b32.cont [4/16] %v95, 128
    %284 = vxpose.xlu0.b32.cont [5/16] %v97, 128
    %285 = vxpose.xlu0.b32.cont [6/16] %v99, 128
    %286 = vxpose.xlu0.b32.cont [7/16] %v101, 128
    %287 = vxpose.xlu0.b32.cont [8/16] %v103, 128
    %288 = vxpose.xlu0.b32.cont [9/16] %v105, 128
    %289 = vxpose.xlu0.b32.cont [10/16] %v107, 128
    %290 = vxpose.xlu0.b32.cont [11/16] %v109, 128
    %291 = vxpose.xlu0.b32.cont [12/16] %v111, 128
    %292 = vxpose.xlu0.b32.cont [13/16] %v113, 128
    %293 = vxpose.xlu0.b32.cont [14/16] %v115, 128
    %294 = vxpose.xlu0.b32.cont [15/16] %v117, 128
    %295 = vxpose.xlu0.b32.end [16/16] %v119, 128
    %v296 = vpop.trf.xlu0
    %v297 = vpop.trf.xlu0
    %v298 = vpop.trf.xlu0
    %v299 = vpop.trf.xlu0
    %v300 = vpop.trf.xlu0
    %v301 = vpop.trf.xlu0
    %v302 = vpop.trf.xlu0
    %v303 = vpop.trf.xlu0
    %v304 = vpop.trf.xlu0
    %v305 = vpop.trf.xlu0
    %v306 = vpop.trf.xlu0
    %v307 = vpop.trf.xlu0
    %v308 = vpop.trf.xlu0
    %v309 = vpop.trf.xlu0
    %v310 = vpop.trf.xlu0
    %v311 = vpop.trf.xlu0
    %312 = vxpose.xlu0.b32.start [1/16] %v120, 128
    %313 = vxpose.xlu0.b32.cont [2/16] %v122, 128
    %314 = vxpose.xlu0.b32.cont [3/16] %v124, 128
    %315 = vxpose.xlu0.b32.cont [4/16] %v126, 128
    %316 = vxpose.xlu0.b32.cont [5/16] %v128, 128
    %317 = vxpose.xlu0.b32.cont [6/16] %v130, 128
    %318 = vxpose.xlu0.b32.cont [7/16] %v132, 128
    %319 = vxpose.xlu0.b32.cont [8/16] %v134, 128
    %320 = vxpose.xlu0.b32.cont [9/16] %v136, 128
    %321 = vxpose.xlu0.b32.cont [10/16] %v138, 128
    %322 = vxpose.xlu0.b32.cont [11/16] %v140, 128
    %323 = vxpose.xlu0.b32.cont [12/16] %v142, 128
    %324 = vxpose.xlu0.b32.cont [13/16] %v144, 128
    %325 = vxpose.xlu0.b32.cont [14/16] %v146, 128
    %326 = vxpose.xlu0.b32.cont [15/16] %v148, 128
    %327 = vxpose.xlu0.b32.end [16/16] %v150, 128
    %v328 = vpop.trf.xlu0
    %v329 = vpop.trf.xlu0
    %v330 = vpop.trf.xlu0
    %v331 = vpop.trf.xlu0
    %v332 = vpop.trf.xlu0
    %v333 = vpop.trf.xlu0
    %v334 = vpop.trf.xlu0
    %v335 = vpop.trf.xlu0
    %v336 = vpop.trf.xlu0
    %v337 = vpop.trf.xlu0
    %v338 = vpop.trf.xlu0
    %v339 = vpop.trf.xlu0
    %v340 = vpop.trf.xlu0
    %v341 = vpop.trf.xlu0
    %v342 = vpop.trf.xlu0
    %v343 = vpop.trf.xlu0
    %344 = vxpose.xlu0.b32.start [1/16] %v121, 128
    %345 = vxpose.xlu0.b32.cont [2/16] %v123, 128
    %346 = vxpose.xlu0.b32.cont [3/16] %v125, 128
    %347 = vxpose.xlu0.b32.cont [4/16] %v127, 128
    %348 = vxpose.xlu0.b32.cont [5/16] %v129, 128
    %349 = vxpose.xlu0.b32.cont [6/16] %v131, 128
    %350 = vxpose.xlu0.b32.cont [7/16] %v133, 128
    %351 = vxpose.xlu0.b32.cont [8/16] %v135, 128
    %352 = vxpose.xlu0.b32.cont [9/16] %v137, 128
    %353 = vxpose.xlu0.b32.cont [10/16] %v139, 128
    %354 = vxpose.xlu0.b32.cont [11/16] %v141, 128
    %355 = vxpose.xlu0.b32.cont [12/16] %v143, 128
    %356 = vxpose.xlu0.b32.cont [13/16] %v145, 128
    %357 = vxpose.xlu0.b32.cont [14/16] %v147, 128
    %358 = vxpose.xlu0.b32.cont [15/16] %v149, 128
    %359 = vxpose.xlu0.b32.end [16/16] %v151, 128
    %v360 = vpop.trf.xlu0
    %v361 = vpop.trf.xlu0
    %v362 = vpop.trf.xlu0
    %v363 = vpop.trf.xlu0
    %v364 = vpop.trf.xlu0
    %v365 = vpop.trf.xlu0
    %v366 = vpop.trf.xlu0
    %v367 = vpop.trf.xlu0
    %v368 = vpop.trf.xlu0
    %v369 = vpop.trf.xlu0
    %v370 = vpop.trf.xlu0
    %v371 = vpop.trf.xlu0
    %v372 = vpop.trf.xlu0
    %v373 = vpop.trf.xlu0
    %v374 = vpop.trf.xlu0
    %v375 = vpop.trf.xlu0
    %376 = vxpose.xlu0.b32.start [1/16] %v152, 128
    %377 = vxpose.xlu0.b32.cont [2/16] %v154, 128
    %378 = vxpose.xlu0.b32.cont [3/16] %v156, 128
    %379 = vxpose.xlu0.b32.cont [4/16] %v158, 128
    %380 = vxpose.xlu0.b32.cont [5/16] %v160, 128
    %381 = vxpose.xlu0.b32.cont [6/16] %v162, 128
    %382 = vxpose.xlu0.b32.cont [7/16] %v164, 128
    %383 = vxpose.xlu0.b32.cont [8/16] %v166, 128
    %384 = vxpose.xlu0.b32.cont [9/16] %v168, 128
    %385 = vxpose.xlu0.b32.cont [10/16] %v170, 128
    %386 = vxpose.xlu0.b32.cont [11/16] %v172, 128
    %387 = vxpose.xlu0.b32.cont [12/16] %v174, 128
    %388 = vxpose.xlu0.b32.cont [13/16] %v176, 128
    %389 = vxpose.xlu0.b32.cont [14/16] %v178, 128
    %390 = vxpose.xlu0.b32.cont [15/16] %v180, 128
    %391 = vxpose.xlu0.b32.end [16/16] %v182, 128
    %v392 = vpop.trf.xlu0
    %v393 = vpop.trf.xlu0
    %v394 = vpop.trf.xlu0
    %v395 = vpop.trf.xlu0
    %v396 = vpop.trf.xlu0
    %v397 = vpop.trf.xlu0
    %v398 = vpop.trf.xlu0
    %v399 = vpop.trf.xlu0
    %v400 = vpop.trf.xlu0
    %v401 = vpop.trf.xlu0
    %v402 = vpop.trf.xlu0
    %v403 = vpop.trf.xlu0
    %v404 = vpop.trf.xlu0
    %v405 = vpop.trf.xlu0
    %v406 = vpop.trf.xlu0
    %v407 = vpop.trf.xlu0
    %408 = vxpose.xlu0.b32.start [1/16] %v153, 128
    %409 = vxpose.xlu0.b32.cont [2/16] %v155, 128
    %410 = vxpose.xlu0.b32.cont [3/16] %v157, 128
    %411 = vxpose.xlu0.b32.cont [4/16] %v159, 128
    %412 = vxpose.xlu0.b32.cont [5/16] %v161, 128
    %413 = vxpose.xlu0.b32.cont [6/16] %v163, 128
    %414 = vxpose.xlu0.b32.cont [7/16] %v165, 128
    %415 = vxpose.xlu0.b32.cont [8/16] %v167, 128
    %416 = vxpose.xlu0.b32.cont [9/16] %v169, 128
    %417 = vxpose.xlu0.b32.cont [10/16] %v171, 128
    %418 = vxpose.xlu0.b32.cont [11/16] %v173, 128
    %419 = vxpose.xlu0.b32.cont [12/16] %v175, 128
    %420 = vxpose.xlu0.b32.cont [13/16] %v177, 128
    %421 = vxpose.xlu0.b32.cont [14/16] %v179, 128
    %422 = vxpose.xlu0.b32.cont [15/16] %v181, 128
    %423 = vxpose.xlu0.b32.end [16/16] %v183, 128
    %v424 = vpop.trf.xlu0
    %v425 = vpop.trf.xlu0
    %v426 = vpop.trf.xlu0
    %v427 = vpop.trf.xlu0
    %v428 = vpop.trf.xlu0
    %v429 = vpop.trf.xlu0
    %v430 = vpop.trf.xlu0
    %v431 = vpop.trf.xlu0
    %v432 = vpop.trf.xlu0
    %v433 = vpop.trf.xlu0
    %v434 = vpop.trf.xlu0
    %v435 = vpop.trf.xlu0
    %v436 = vpop.trf.xlu0
    %v437 = vpop.trf.xlu0
    %v438 = vpop.trf.xlu0
    %v439 = vpop.trf.xlu0
    %440 = vmatprep.subr.mxu0 %v87
    %441 = vmatpush1.msra.mxu0 %v86
    %442 = vmatprep.subr.mxu0 %v85
    %443 = vmatpush1.msra.mxu0 %v84
    %444 = vmatprep.subr.mxu0 %v83
    %445 = vmatpush1.msra.mxu0 %v82
    %446 = vmatprep.subr.mxu0 %v81
    %447 = vmatpush1.msra.mxu0 %v80
    %448 = vmatprep.subr.mxu0 %v79
    %449 = vmatpush1.msra.mxu0 %v78
    %450 = vmatprep.subr.mxu0 %v77
    %451 = vmatpush1.msra.mxu0 %v76
    %452 = vmatprep.subr.mxu0 %v75
    %453 = vmatpush1.msra.mxu0 %v74
    %454 = vmatprep.subr.mxu0 %v73
    %455 = vmatpush1.msra.mxu0 %v72
    %456 = vmatprep.subr.mxu0 %v71
    %457 = vmatpush1.msra.mxu0 %v70
    %458 = vmatprep.subr.mxu0 %v69
    %459 = vmatpush1.msra.mxu0 %v68
    %460 = vmatprep.subr.mxu0 %v67
    %461 = vmatpush1.msra.mxu0 %v66
    %462 = vmatprep.subr.mxu0 %v65
    %463 = vmatpush1.msra.mxu0 %v64
    %464 = vmatprep.subr.mxu0 %v63
    %465 = vmatpush1.msra.mxu0 %v62
    %466 = vmatprep.subr.mxu0 %v61
    %467 = vmatpush1.msra.mxu0 %v60
    %468 = vmatprep.subr.mxu0 %v59
    %469 = vmatpush1.msra.mxu0 %v58
    %470 = vmatprep.subr.mxu0 %v57
    %471 = vmatpush1.msra.mxu0 %v56
    %472 = vmatprep.subr.mxu0 %v119
    %473 = vmatpush2.msra.mxu0 %v118
    %474 = vmatprep.subr.mxu0 %v117
    %475 = vmatpush2.msra.mxu0 %v116
    %476 = vmatprep.subr.mxu0 %v115
    %477 = vmatpush2.msra.mxu0 %v114
    %478 = vmatprep.subr.mxu0 %v113
    %479 = vmatpush2.msra.mxu0 %v112
    %480 = vmatprep.subr.mxu0 %v111
    %481 = vmatpush2.msra.mxu0 %v110
    %482 = vmatprep.subr.mxu0 %v109
    %483 = vmatpush2.msra.mxu0 %v108
    %484 = vmatprep.subr.mxu0 %v107
    %485 = vmatpush2.msra.mxu0 %v106
    %486 = vmatprep.subr.mxu0 %v105
    %487 = vmatpush2.msra.mxu0 %v104
    %488 = vmatprep.subr.mxu0 %v103
    %489 = vmatpush2.msra.mxu0 %v102
    %490 = vmatprep.subr.mxu0 %v101
    %491 = vmatpush2.msra.mxu0 %v100
    %492 = vmatprep.subr.mxu0 %v99
    %493 = vmatpush2.msra.mxu0 %v98
    %494 = vmatprep.subr.mxu0 %v97
    %495 = vmatpush2.msra.mxu0 %v96
    %496 = vmatprep.subr.mxu0 %v95
    %497 = vmatpush2.msra.mxu0 %v94
    %498 = vmatprep.subr.mxu0 %v93
    %499 = vmatpush2.msra.mxu0 %v92
    %500 = vmatprep.subr.mxu0 %v91
    %501 = vmatpush2.msra.mxu0 %v90
    %502 = vmatprep.subr.mxu0 %v89
    %503 = vmatpush2.msra.mxu0 %v88
    %504 = vmatprep.mubr.f32.mxu0 %v264
    %505 = vmatmul.mubr.f32.gmra.mxu0 %v200
    %v506 = vpop.f32.mrf.mxu0
    %v507 = vadd.f32 0.0, %v506
    %v508 = vpop.f32.mrf.mxu0
    %v509 = vadd.f32 0.0, %v508
    %510 = vmatprep.mubr.f32.mxu0 %v265
    %511 = vmatmul.mubr.f32.gmra.mxu0 %v201
    %v512 = vpop.f32.mrf.mxu0
    %v513 = vadd.f32 0.0, %v512
    %v514 = vpop.f32.mrf.mxu0
    %v515 = vadd.f32 0.0, %v514
    %516 = vmatprep.mubr.f32.mxu0 %v266
    %517 = vmatmul.mubr.f32.gmra.mxu0 %v202
    %v518 = vpop.f32.mrf.mxu0
    %v519 = vadd.f32 0.0, %v518
    %v520 = vpop.f32.mrf.mxu0
    %v521 = vadd.f32 0.0, %v520
    %522 = vmatprep.mubr.f32.mxu0 %v267
    %523 = vmatmul.mubr.f32.gmra.mxu0 %v203
    %v524 = vpop.f32.mrf.mxu0
    %v525 = vadd.f32 0.0, %v524
    %v526 = vpop.f32.mrf.mxu0
    %v527 = vadd.f32 0.0, %v526
    %528 = vmatprep.mubr.f32.mxu0 %v268
    %529 = vmatmul.mubr.f32.gmra.mxu0 %v204
    %v530 = vpop.f32.mrf.mxu0
    %v531 = vadd.f32 0.0, %v530
    %v532 = vpop.f32.mrf.mxu0
    %v533 = vadd.f32 0.0, %v532
    %534 = vmatprep.mubr.f32.mxu0 %v269
    %535 = vmatmul.mubr.f32.gmra.mxu0 %v205
    %v536 = vpop.f32.mrf.mxu0
    %v537 = vadd.f32 0.0, %v536
    %v538 = vpop.f32.mrf.mxu0
    %v539 = vadd.f32 0.0, %v538
    %540 = vmatprep.mubr.f32.mxu0 %v270
    %541 = vmatmul.mubr.f32.gmra.mxu0 %v206
    %v542 = vpop.f32.mrf.mxu0
    %v543 = vadd.f32 0.0, %v542
    %v544 = vpop.f32.mrf.mxu0
    %v545 = vadd.f32 0.0, %v544
    %546 = vmatprep.mubr.f32.mxu0 %v271
    %547 = vmatmul.mubr.f32.gmra.mxu0 %v207
    %v548 = vpop.f32.mrf.mxu0
    %v549 = vadd.f32 0.0, %v548
    %v550 = vpop.f32.mrf.mxu0
    %v551 = vadd.f32 0.0, %v550
    %552 = vmatprep.mubr.f32.mxu0 %v272
    %553 = vmatmul.mubr.f32.gmra.mxu0 %v208
    %v554 = vpop.f32.mrf.mxu0
    %v555 = vadd.f32 0.0, %v554
    %v556 = vpop.f32.mrf.mxu0
    %v557 = vadd.f32 0.0, %v556
    %558 = vmatprep.mubr.f32.mxu0 %v273
    %559 = vmatmul.mubr.f32.gmra.mxu0 %v209
    %v560 = vpop.f32.mrf.mxu0
    %v561 = vadd.f32 0.0, %v560
    %v562 = vpop.f32.mrf.mxu0
    %v563 = vadd.f32 0.0, %v562
    %564 = vmatprep.mubr.f32.mxu0 %v274
    %565 = vmatmul.mubr.f32.gmra.mxu0 %v210
    %v566 = vpop.f32.mrf.mxu0
    %v567 = vadd.f32 0.0, %v566
    %v568 = vpop.f32.mrf.mxu0
    %v569 = vadd.f32 0.0, %v568
    %570 = vmatprep.mubr.f32.mxu0 %v275
    %571 = vmatmul.mubr.f32.gmra.mxu0 %v211
    %v572 = vpop.f32.mrf.mxu0
    %v573 = vadd.f32 0.0, %v572
    %v574 = vpop.f32.mrf.mxu0
    %v575 = vadd.f32 0.0, %v574
    %576 = vmatprep.mubr.f32.mxu0 %v276
    %577 = vmatmul.mubr.f32.gmra.mxu0 %v212
    %v578 = vpop.f32.mrf.mxu0
    %v579 = vadd.f32 0.0, %v578
    %v580 = vpop.f32.mrf.mxu0
    %v581 = vadd.f32 0.0, %v580
    %582 = vmatprep.mubr.f32.mxu0 %v277
    %583 = vmatmul.mubr.f32.gmra.mxu0 %v213
    %v584 = vpop.f32.mrf.mxu0
    %v585 = vadd.f32 0.0, %v584
    %v586 = vpop.f32.mrf.mxu0
    %v587 = vadd.f32 0.0, %v586
    %588 = vmatprep.mubr.f32.mxu0 %v278
    %589 = vmatmul.mubr.f32.gmra.mxu0 %v214
    %v590 = vpop.f32.mrf.mxu0
    %v591 = vadd.f32 0.0, %v590
    %v592 = vpop.f32.mrf.mxu0
    %v593 = vadd.f32 0.0, %v592
    %594 = vmatprep.mubr.f32.mxu0 %v279
    %595 = vmatmul.mubr.f32.gmra.mxu0 %v215
    %v596 = vpop.f32.mrf.mxu0
    %v597 = vadd.f32 0.0, %v596
    %v598 = vpop.f32.mrf.mxu0
    %v599 = vadd.f32 0.0, %v598
    %600 = vmatprep.mubr.f32.mxu0 %v296
    %601 = vmatmul.mubr.f32.gmra.mxu0 %v232
    %v602 = vpop.f32.mrf.mxu0
    %v603 = vadd.f32 0.0, %v602
    %v604 = vpop.f32.mrf.mxu0
    %v605 = vadd.f32 0.0, %v604
    %606 = vmatprep.mubr.f32.mxu0 %v297
    %607 = vmatmul.mubr.f32.gmra.mxu0 %v233
    %v608 = vpop.f32.mrf.mxu0
    %v609 = vadd.f32 0.0, %v608
    %v610 = vpop.f32.mrf.mxu0
    %v611 = vadd.f32 0.0, %v610
    %612 = vmatprep.mubr.f32.mxu0 %v298
    %613 = vmatmul.mubr.f32.gmra.mxu0 %v234
    %v614 = vpop.f32.mrf.mxu0
    %v615 = vadd.f32 0.0, %v614
    %v616 = vpop.f32.mrf.mxu0
    %v617 = vadd.f32 0.0, %v616
    %618 = vmatprep.mubr.f32.mxu0 %v299
    %619 = vmatmul.mubr.f32.gmra.mxu0 %v235
    %v620 = vpop.f32.mrf.mxu0
    %v621 = vadd.f32 0.0, %v620
    %v622 = vpop.f32.mrf.mxu0
    %v623 = vadd.f32 0.0, %v622
    %624 = vmatprep.mubr.f32.mxu0 %v300
    %625 = vmatmul.mubr.f32.gmra.mxu0 %v236
    %v626 = vpop.f32.mrf.mxu0
    %v627 = vadd.f32 0.0, %v626
    %v628 = vpop.f32.mrf.mxu0
    %v629 = vadd.f32 0.0, %v628
    %630 = vmatprep.mubr.f32.mxu0 %v301
    %631 = vmatmul.mubr.f32.gmra.mxu0 %v237
    %v632 = vpop.f32.mrf.mxu0
    %v633 = vadd.f32 0.0, %v632
    %v634 = vpop.f32.mrf.mxu0
    %v635 = vadd.f32 0.0, %v634
    %636 = vmatprep.mubr.f32.mxu0 %v302
    %637 = vmatmul.mubr.f32.gmra.mxu0 %v238
    %v638 = vpop.f32.mrf.mxu0
    %v639 = vadd.f32 0.0, %v638
    %v640 = vpop.f32.mrf.mxu0
    %v641 = vadd.f32 0.0, %v640
    %642 = vmatprep.mubr.f32.mxu0 %v303
    %643 = vmatmul.mubr.f32.gmra.mxu0 %v239
    %v644 = vpop.f32.mrf.mxu0
    %v645 = vadd.f32 0.0, %v644
    %v646 = vpop.f32.mrf.mxu0
    %v647 = vadd.f32 0.0, %v646
    %648 = vmatprep.mubr.f32.mxu0 %v304
    %649 = vmatmul.mubr.f32.gmra.mxu0 %v240
    %v650 = vpop.f32.mrf.mxu0
    %v651 = vadd.f32 0.0, %v650
    %v652 = vpop.f32.mrf.mxu0
    %v653 = vadd.f32 0.0, %v652
    %654 = vmatprep.mubr.f32.mxu0 %v305
    %655 = vmatmul.mubr.f32.gmra.mxu0 %v241
    %v656 = vpop.f32.mrf.mxu0
    %v657 = vadd.f32 0.0, %v656
    %v658 = vpop.f32.mrf.mxu0
    %v659 = vadd.f32 0.0, %v658
    %660 = vmatprep.mubr.f32.mxu0 %v306
    %661 = vmatmul.mubr.f32.gmra.mxu0 %v242
    %v662 = vpop.f32.mrf.mxu0
    %v663 = vadd.f32 0.0, %v662
    %v664 = vpop.f32.mrf.mxu0
    %v665 = vadd.f32 0.0, %v664
    %666 = vmatprep.mubr.f32.mxu0 %v307
    %667 = vmatmul.mubr.f32.gmra.mxu0 %v243
    %v668 = vpop.f32.mrf.mxu0
    %v669 = vadd.f32 0.0, %v668
    %v670 = vpop.f32.mrf.mxu0
    %v671 = vadd.f32 0.0, %v670
    %672 = vmatprep.mubr.f32.mxu0 %v308
    %673 = vmatmul.mubr.f32.gmra.mxu0 %v244
    %v674 = vpop.f32.mrf.mxu0
    %v675 = vadd.f32 0.0, %v674
    %v676 = vpop.f32.mrf.mxu0
    %v677 = vadd.f32 0.0, %v676
    %678 = vmatprep.mubr.f32.mxu0 %v309
    %679 = vmatmul.mubr.f32.gmra.mxu0 %v245
    %v680 = vpop.f32.mrf.mxu0
    %v681 = vadd.f32 0.0, %v680
    %v682 = vpop.f32.mrf.mxu0
    %v683 = vadd.f32 0.0, %v682
    %684 = vmatprep.mubr.f32.mxu0 %v310
    %685 = vmatmul.mubr.f32.gmra.mxu0 %v246
    %v686 = vpop.f32.mrf.mxu0
    %v687 = vadd.f32 0.0, %v686
    %v688 = vpop.f32.mrf.mxu0
    %v689 = vadd.f32 0.0, %v688
    %690 = vmatprep.mubr.f32.mxu0 %v311
    %691 = vmatmul.mubr.f32.gmra.mxu0 %v247
    %v692 = vpop.f32.mrf.mxu0
    %v693 = vadd.f32 0.0, %v692
    %v694 = vpop.f32.mrf.mxu0
    %v695 = vadd.f32 0.0, %v694
    %696 = vdwg.mxu0
    %697 = vmatprep.subr.mxu0 %v151
    %698 = vmatpush1.msra.mxu0 %v150
    %699 = vmatprep.subr.mxu0 %v149
    %700 = vmatpush1.msra.mxu0 %v148
    %701 = vmatprep.subr.mxu0 %v147
    %702 = vmatpush1.msra.mxu0 %v146
    %703 = vmatprep.subr.mxu0 %v145
    %704 = vmatpush1.msra.mxu0 %v144
    %705 = vmatprep.subr.mxu0 %v143
    %706 = vmatpush1.msra.mxu0 %v142
    %707 = vmatprep.subr.mxu0 %v141
    %708 = vmatpush1.msra.mxu0 %v140
    %709 = vmatprep.subr.mxu0 %v139
    %710 = vmatpush1.msra.mxu0 %v138
    %711 = vmatprep.subr.mxu0 %v137
    %712 = vmatpush1.msra.mxu0 %v136
    %713 = vmatprep.subr.mxu0 %v135
    %714 = vmatpush1.msra.mxu0 %v134
    %715 = vmatprep.subr.mxu0 %v133
    %716 = vmatpush1.msra.mxu0 %v132
    %717 = vmatprep.subr.mxu0 %v131
    %718 = vmatpush1.msra.mxu0 %v130
    %719 = vmatprep.subr.mxu0 %v129
    %720 = vmatpush1.msra.mxu0 %v128
    %721 = vmatprep.subr.mxu0 %v127
    %722 = vmatpush1.msra.mxu0 %v126
    %723 = vmatprep.subr.mxu0 %v125
    %724 = vmatpush1.msra.mxu0 %v124
    %725 = vmatprep.subr.mxu0 %v123
    %726 = vmatpush1.msra.mxu0 %v122
    %727 = vmatprep.subr.mxu0 %v121
    %728 = vmatpush1.msra.mxu0 %v120
    %729 = vmatprep.subr.mxu0 %v183
    %730 = vmatpush2.msra.mxu0 %v182
    %731 = vmatprep.subr.mxu0 %v181
    %732 = vmatpush2.msra.mxu0 %v180
    %733 = vmatprep.subr.mxu0 %v179
    %734 = vmatpush2.msra.mxu0 %v178
    %735 = vmatprep.subr.mxu0 %v177
    %736 = vmatpush2.msra.mxu0 %v176
    %737 = vmatprep.subr.mxu0 %v175
    %738 = vmatpush2.msra.mxu0 %v174
    %739 = vmatprep.subr.mxu0 %v173
    %740 = vmatpush2.msra.mxu0 %v172
    %741 = vmatprep.subr.mxu0 %v171
    %742 = vmatpush2.msra.mxu0 %v170
    %743 = vmatprep.subr.mxu0 %v169
    %744 = vmatpush2.msra.mxu0 %v168
    %745 = vmatprep.subr.mxu0 %v167
    %746 = vmatpush2.msra.mxu0 %v166
    %747 = vmatprep.subr.mxu0 %v165
    %748 = vmatpush2.msra.mxu0 %v164
    %749 = vmatprep.subr.mxu0 %v163
    %750 = vmatpush2.msra.mxu0 %v162
    %751 = vmatprep.subr.mxu0 %v161
    %752 = vmatpush2.msra.mxu0 %v160
    %753 = vmatprep.subr.mxu0 %v159
    %754 = vmatpush2.msra.mxu0 %v158
    %755 = vmatprep.subr.mxu0 %v157
    %756 = vmatpush2.msra.mxu0 %v156
    %757 = vmatprep.subr.mxu0 %v155
    %758 = vmatpush2.msra.mxu0 %v154
    %759 = vmatprep.subr.mxu0 %v153
    %760 = vmatpush2.msra.mxu0 %v152
    %761 = vmatprep.mubr.f32.mxu0 %v392
    %762 = vmatmul.mubr.f32.gmra.mxu0 %v328
    %v763 = vpop.f32.mrf.mxu0
    %v764 = vadd.f32 %v507, %v763
    %v765 = vpop.f32.mrf.mxu0
    %v766 = vadd.f32 %v509, %v765
    %767 = vmatprep.mubr.f32.mxu0 %v393
    %768 = vmatmul.mubr.f32.gmra.mxu0 %v329
    %v769 = vpop.f32.mrf.mxu0
    %v770 = vadd.f32 %v513, %v769
    %v771 = vpop.f32.mrf.mxu0
    %v772 = vadd.f32 %v515, %v771
    %773 = vmatprep.mubr.f32.mxu0 %v394
    %774 = vmatmul.mubr.f32.gmra.mxu0 %v330
    %v775 = vpop.f32.mrf.mxu0
    %v776 = vadd.f32 %v519, %v775
    %v777 = vpop.f32.mrf.mxu0
    %v778 = vadd.f32 %v521, %v777
    %779 = vmatprep.mubr.f32.mxu0 %v395
    %780 = vmatmul.mubr.f32.gmra.mxu0 %v331
    %v781 = vpop.f32.mrf.mxu0
    %v782 = vadd.f32 %v525, %v781
    %v783 = vpop.f32.mrf.mxu0
    %v784 = vadd.f32 %v527, %v783
    %785 = vmatprep.mubr.f32.mxu0 %v396
    %786 = vmatmul.mubr.f32.gmra.mxu0 %v332
    %v787 = vpop.f32.mrf.mxu0
    %v788 = vadd.f32 %v531, %v787
    %v789 = vpop.f32.mrf.mxu0
    %v790 = vadd.f32 %v533, %v789
    %791 = vmatprep.mubr.f32.mxu0 %v397
    %792 = vmatmul.mubr.f32.gmra.mxu0 %v333
    %v793 = vpop.f32.mrf.mxu0
    %v794 = vadd.f32 %v537, %v793
    %v795 = vpop.f32.mrf.mxu0
    %v796 = vadd.f32 %v539, %v795
    %797 = vmatprep.mubr.f32.mxu0 %v398
    %798 = vmatmul.mubr.f32.gmra.mxu0 %v334
    %v799 = vpop.f32.mrf.mxu0
    %v800 = vadd.f32 %v543, %v799
    %v801 = vpop.f32.mrf.mxu0
    %v802 = vadd.f32 %v545, %v801
    %803 = vmatprep.mubr.f32.mxu0 %v399
    %804 = vmatmul.mubr.f32.gmra.mxu0 %v335
    %v805 = vpop.f32.mrf.mxu0
    %v806 = vadd.f32 %v549, %v805
    %v807 = vpop.f32.mrf.mxu0
    %v808 = vadd.f32 %v551, %v807
    %809 = vmatprep.mubr.f32.mxu0 %v400
    %810 = vmatmul.mubr.f32.gmra.mxu0 %v336
    %v811 = vpop.f32.mrf.mxu0
    %v812 = vadd.f32 %v555, %v811
    %v813 = vpop.f32.mrf.mxu0
    %v814 = vadd.f32 %v557, %v813
    %815 = vmatprep.mubr.f32.mxu0 %v401
    %816 = vmatmul.mubr.f32.gmra.mxu0 %v337
    %v817 = vpop.f32.mrf.mxu0
    %v818 = vadd.f32 %v561, %v817
    %v819 = vpop.f32.mrf.mxu0
    %v820 = vadd.f32 %v563, %v819
    %821 = vmatprep.mubr.f32.mxu0 %v402
    %822 = vmatmul.mubr.f32.gmra.mxu0 %v338
    %v823 = vpop.f32.mrf.mxu0
    %v824 = vadd.f32 %v567, %v823
    %v825 = vpop.f32.mrf.mxu0
    %v826 = vadd.f32 %v569, %v825
    %827 = vmatprep.mubr.f32.mxu0 %v403
    %828 = vmatmul.mubr.f32.gmra.mxu0 %v339
    %v829 = vpop.f32.mrf.mxu0
    %v830 = vadd.f32 %v573, %v829
    %v831 = vpop.f32.mrf.mxu0
    %v832 = vadd.f32 %v575, %v831
    %833 = vmatprep.mubr.f32.mxu0 %v404
    %834 = vmatmul.mubr.f32.gmra.mxu0 %v340
    %v835 = vpop.f32.mrf.mxu0
    %v836 = vadd.f32 %v579, %v835
    %v837 = vpop.f32.mrf.mxu0
    %v838 = vadd.f32 %v581, %v837
    %839 = vmatprep.mubr.f32.mxu0 %v405
    %840 = vmatmul.mubr.f32.gmra.mxu0 %v341
    %v841 = vpop.f32.mrf.mxu0
    %v842 = vadd.f32 %v585, %v841
    %v843 = vpop.f32.mrf.mxu0
    %v844 = vadd.f32 %v587, %v843
    %845 = vmatprep.mubr.f32.mxu0 %v406
    %846 = vmatmul.mubr.f32.gmra.mxu0 %v342
    %v847 = vpop.f32.mrf.mxu0
    %v848 = vadd.f32 %v591, %v847
    %v849 = vpop.f32.mrf.mxu0
    %v850 = vadd.f32 %v593, %v849
    %851 = vmatprep.mubr.f32.mxu0 %v407
    %852 = vmatmul.mubr.f32.gmra.mxu0 %v343
    %v853 = vpop.f32.mrf.mxu0
    %v854 = vadd.f32 %v597, %v853
    %v855 = vpop.f32.mrf.mxu0
    %v856 = vadd.f32 %v599, %v855
    %857 = vmatprep.mubr.f32.mxu0 %v424
    %858 = vmatmul.mubr.f32.gmra.mxu0 %v360
    %v859 = vpop.f32.mrf.mxu0
    %v860 = vadd.f32 %v603, %v859
    %v861 = vpop.f32.mrf.mxu0
    %v862 = vadd.f32 %v605, %v861
    %863 = vmatprep.mubr.f32.mxu0 %v425
    %864 = vmatmul.mubr.f32.gmra.mxu0 %v361
    %v865 = vpop.f32.mrf.mxu0
    %v866 = vadd.f32 %v609, %v865
    %v867 = vpop.f32.mrf.mxu0
    %v868 = vadd.f32 %v611, %v867
    %869 = vmatprep.mubr.f32.mxu0 %v426
    %870 = vmatmul.mubr.f32.gmra.mxu0 %v362
    %v871 = vpop.f32.mrf.mxu0
    %v872 = vadd.f32 %v615, %v871
    %v873 = vpop.f32.mrf.mxu0
    %v874 = vadd.f32 %v617, %v873
    %875 = vmatprep.mubr.f32.mxu0 %v427
    %876 = vmatmul.mubr.f32.gmra.mxu0 %v363
    %v877 = vpop.f32.mrf.mxu0
    %v878 = vadd.f32 %v621, %v877
    %v879 = vpop.f32.mrf.mxu0
    %v880 = vadd.f32 %v623, %v879
    %881 = vmatprep.mubr.f32.mxu0 %v428
    %882 = vmatmul.mubr.f32.gmra.mxu0 %v364
    %v883 = vpop.f32.mrf.mxu0
    %v884 = vadd.f32 %v627, %v883
    %v885 = vpop.f32.mrf.mxu0
    %v886 = vadd.f32 %v629, %v885
    %887 = vmatprep.mubr.f32.mxu0 %v429
    %888 = vmatmul.mubr.f32.gmra.mxu0 %v365
    %v889 = vpop.f32.mrf.mxu0
    %v890 = vadd.f32 %v633, %v889
    %v891 = vpop.f32.mrf.mxu0
    %v892 = vadd.f32 %v635, %v891
    %893 = vmatprep.mubr.f32.mxu0 %v430
    %894 = vmatmul.mubr.f32.gmra.mxu0 %v366
    %v895 = vpop.f32.mrf.mxu0
    %v896 = vadd.f32 %v639, %v895
    %v897 = vpop.f32.mrf.mxu0
    %v898 = vadd.f32 %v641, %v897
    %899 = vmatprep.mubr.f32.mxu0 %v431
    %900 = vmatmul.mubr.f32.gmra.mxu0 %v367
    %v901 = vpop.f32.mrf.mxu0
    %v902 = vadd.f32 %v645, %v901
    %v903 = vpop.f32.mrf.mxu0
    %v904 = vadd.f32 %v647, %v903
    %905 = vmatprep.mubr.f32.mxu0 %v432
    %906 = vmatmul.mubr.f32.gmra.mxu0 %v368
    %v907 = vpop.f32.mrf.mxu0
    %v908 = vadd.f32 %v651, %v907
    %v909 = vpop.f32.mrf.mxu0
    %v910 = vadd.f32 %v653, %v909
    %911 = vmatprep.mubr.f32.mxu0 %v433
    %912 = vmatmul.mubr.f32.gmra.mxu0 %v369
    %v913 = vpop.f32.mrf.mxu0
    %v914 = vadd.f32 %v657, %v913
    %v915 = vpop.f32.mrf.mxu0
    %v916 = vadd.f32 %v659, %v915
    %917 = vmatprep.mubr.f32.mxu0 %v434
    %918 = vmatmul.mubr.f32.gmra.mxu0 %v370
    %v919 = vpop.f32.mrf.mxu0
    %v920 = vadd.f32 %v663, %v919
    %v921 = vpop.f32.mrf.mxu0
    %v922 = vadd.f32 %v665, %v921
    %923 = vmatprep.mubr.f32.mxu0 %v435
    %924 = vmatmul.mubr.f32.gmra.mxu0 %v371
    %v925 = vpop.f32.mrf.mxu0
    %v926 = vadd.f32 %v669, %v925
    %v927 = vpop.f32.mrf.mxu0
    %v928 = vadd.f32 %v671, %v927
    %929 = vmatprep.mubr.f32.mxu0 %v436
    %930 = vmatmul.mubr.f32.gmra.mxu0 %v372
    %v931 = vpop.f32.mrf.mxu0
    %v932 = vadd.f32 %v675, %v931
    %v933 = vpop.f32.mrf.mxu0
    %v934 = vadd.f32 %v677, %v933
    %935 = vmatprep.mubr.f32.mxu0 %v437
    %936 = vmatmul.mubr.f32.gmra.mxu0 %v373
    %v937 = vpop.f32.mrf.mxu0
    %v938 = vadd.f32 %v681, %v937
    %v939 = vpop.f32.mrf.mxu0
    %v940 = vadd.f32 %v683, %v939
    %941 = vmatprep.mubr.f32.mxu0 %v438
    %942 = vmatmul.mubr.f32.gmra.mxu0 %v374
    %v943 = vpop.f32.mrf.mxu0
    %v944 = vadd.f32 %v687, %v943
    %v945 = vpop.f32.mrf.mxu0
    %v946 = vadd.f32 %v689, %v945
    %947 = vmatprep.mubr.f32.mxu0 %v439
    %948 = vmatmul.mubr.f32.gmra.mxu0 %v375
    %v949 = vpop.f32.mrf.mxu0
    %v950 = vadd.f32 %v693, %v949
    %v951 = vpop.f32.mrf.mxu0
    %v952 = vadd.f32 %v695, %v951
    %953 = vdwg.mxu0
    %954 = vxpose.xlu0.b32.start [1/16] %v40, 128
    %955 = vxpose.xlu0.b32.cont [2/16] %v42, 128
    %956 = vxpose.xlu0.b32.cont [3/16] %v44, 128
    %957 = vxpose.xlu0.b32.cont [4/16] %v46, 128
    %958 = vxpose.xlu0.b32.cont [5/16] %v48, 128
    %959 = vxpose.xlu0.b32.cont [6/16] %v50, 128
    %960 = vxpose.xlu0.b32.cont [7/16] %v52, 128
    %961 = vxpose.xlu0.b32.cont [8/16] %v54, 128
    %962 = vxpose.xlu0.b32.cont [9/16] 0.0, 128
    %963 = vxpose.xlu0.b32.cont [10/16] 0.0, 128
    %964 = vxpose.xlu0.b32.cont [11/16] 0.0, 128
    %965 = vxpose.xlu0.b32.cont [12/16] 0.0, 128
    %966 = vxpose.xlu0.b32.cont [13/16] 0.0, 128
    %967 = vxpose.xlu0.b32.cont [14/16] 0.0, 128
    %968 = vxpose.xlu0.b32.cont [15/16] 0.0, 128
    %969 = vxpose.xlu0.b32.end [16/16] 0.0, 128
    %v970 = vpop.trf.xlu0
    %v971 = vpop.trf.xlu0
    %v972 = vpop.trf.xlu0
    %v973 = vpop.trf.xlu0
    %v974 = vpop.trf.xlu0
    %v975 = vpop.trf.xlu0
    %v976 = vpop.trf.xlu0
    %v977 = vpop.trf.xlu0
    %v978 = vpop.trf.xlu0
    %v979 = vpop.trf.xlu0
    %v980 = vpop.trf.xlu0
    %v981 = vpop.trf.xlu0
    %v982 = vpop.trf.xlu0
    %v983 = vpop.trf.xlu0
    %v984 = vpop.trf.xlu0
    %v985 = vpop.trf.xlu0
    %986 = vxpose.xlu0.b32.start [1/16] %v41, 128
    %987 = vxpose.xlu0.b32.cont [2/16] %v43, 128
    %988 = vxpose.xlu0.b32.cont [3/16] %v45, 128
    %989 = vxpose.xlu0.b32.cont [4/16] %v47, 128
    %990 = vxpose.xlu0.b32.cont [5/16] %v49, 128
    %991 = vxpose.xlu0.b32.cont [6/16] %v51, 128
    %992 = vxpose.xlu0.b32.cont [7/16] %v53, 128
    %993 = vxpose.xlu0.b32.cont [8/16] %v55, 128
    %994 = vxpose.xlu0.b32.cont [9/16] 0.0, 128
    %995 = vxpose.xlu0.b32.cont [10/16] 0.0, 128
    %996 = vxpose.xlu0.b32.cont [11/16] 0.0, 128
    %997 = vxpose.xlu0.b32.cont [12/16] 0.0, 128
    %998 = vxpose.xlu0.b32.cont [13/16] 0.0, 128
    %999 = vxpose.xlu0.b32.cont [14/16] 0.0, 128
    %1000 = vxpose.xlu0.b32.cont [15/16] 0.0, 128
    %1001 = vxpose.xlu0.b32.end [16/16] 0.0, 128
    %v1002 = vpop.trf.xlu0
    %v1003 = vpop.trf.xlu0
    %v1004 = vpop.trf.xlu0
    %v1005 = vpop.trf.xlu0
    %v1006 = vpop.trf.xlu0
    %v1007 = vpop.trf.xlu0
    %v1008 = vpop.trf.xlu0
    %v1009 = vpop.trf.xlu0
    %v1010 = vpop.trf.xlu0
    %v1011 = vpop.trf.xlu0
    %v1012 = vpop.trf.xlu0
    %v1013 = vpop.trf.xlu0
    %v1014 = vpop.trf.xlu0
    %v1015 = vpop.trf.xlu0
    %v1016 = vpop.trf.xlu0
    %v1017 = vpop.trf.xlu0
    %vm1018 = vcmask 523264
    %v1020 = vsel %vm1018, %v970, 0
    %v1023 = vsel %vm1018, %v971, 0
    %v1026 = vsel %vm1018, %v972, 0
    %v1029 = vsel %vm1018, %v973, 0
    %v1032 = vsel %vm1018, %v974, 0
    %v1035 = vsel %vm1018, %v975, 0
    %v1038 = vsel %vm1018, %v976, 0
    %v1041 = vsel %vm1018, %v977, 0
    %v1044 = vsel %vm1018, %v978, 0
    %v1047 = vsel %vm1018, %v979, 0
    %v1050 = vsel %vm1018, %v980, 0
    %v1053 = vsel %vm1018, %v981, 0
    %v1056 = vsel %vm1018, %v982, 0
    %v1059 = vsel %vm1018, %v983, 0
    %v1062 = vsel %vm1018, %v984, 0
    %v1065 = vsel %vm1018, %v985, 0
    %v1068 = vsel %vm1018, %v1002, 0
    %v1071 = vsel %vm1018, %v1003, 0
    %v1074 = vsel %vm1018, %v1004, 0
    %v1077 = vsel %vm1018, %v1005, 0
    %v1080 = vsel %vm1018, %v1006, 0
    %v1083 = vsel %vm1018, %v1007, 0
    %v1086 = vsel %vm1018, %v1008, 0
    %v1089 = vsel %vm1018, %v1009, 0
    %v1092 = vsel %vm1018, %v1010, 0
    %v1095 = vsel %vm1018, %v1011, 0
    %v1098 = vsel %vm1018, %v1012, 0
    %v1101 = vsel %vm1018, %v1013, 0
    %v1104 = vsel %vm1018, %v1014, 0
    %v1107 = vsel %vm1018, %v1015, 0
    %v1110 = vsel %vm1018, %v1016, 0
    %v1113 = vsel %vm1018, %v1017, 0
    %1115 = vmatprep.subr.mxu0 0.0
    %1116 = vmatpush1.msra.mxu0 0.0
    %1117 = vmatprep.subr.mxu0 0.0
    %1118 = vmatpush1.msra.mxu0 0.0
    %1119 = vmatprep.subr.mxu0 0.0
    %1120 = vmatpush1.msra.mxu0 0.0
    %1121 = vmatprep.subr.mxu0 0.0
    %1122 = vmatpush1.msra.mxu0 0.0
    %1123 = vmatprep.subr.mxu0 0.0
    %1124 = vmatpush1.msra.mxu0 0.0
    %1125 = vmatprep.subr.mxu0 0.0
    %1126 = vmatpush1.msra.mxu0 0.0
    %1127 = vmatprep.subr.mxu0 0.0
    %1128 = vmatpush1.msra.mxu0 0.0
    %1129 = vmatprep.subr.mxu0 0.0
    %1130 = vmatpush1.msra.mxu0 0.0
    %1131 = vmatprep.subr.mxu0 %v55
    %1132 = vmatpush1.msra.mxu0 %v54
    %1133 = vmatprep.subr.mxu0 %v53
    %1134 = vmatpush1.msra.mxu0 %v52
    %1135 = vmatprep.subr.mxu0 %v51
    %1136 = vmatpush1.msra.mxu0 %v50
    %1137 = vmatprep.subr.mxu0 %v49
    %1138 = vmatpush1.msra.mxu0 %v48
    %1139 = vmatprep.subr.mxu0 %v47
    %1140 = vmatpush1.msra.mxu0 %v46
    %1141 = vmatprep.subr.mxu0 %v45
    %1142 = vmatpush1.msra.mxu0 %v44
    %1143 = vmatprep.subr.mxu0 %v43
    %1144 = vmatpush1.msra.mxu0 %v42
    %1145 = vmatprep.subr.mxu0 %v41
    %1146 = vmatpush1.msra.mxu0 %v40
    %1147 = vmatprep.subr.mxu0 0.0
    %1148 = vmatpush2.msra.mxu0 0.0
    %1149 = vmatprep.subr.mxu0 0.0
    %1150 = vmatpush2.msra.mxu0 0.0
    %1151 = vmatprep.subr.mxu0 0.0
    %1152 = vmatpush2.msra.mxu0 0.0
    %1153 = vmatprep.subr.mxu0 0.0
    %1154 = vmatpush2.msra.mxu0 0.0
    %1155 = vmatprep.subr.mxu0 0.0
    %1156 = vmatpush2.msra.mxu0 0.0
    %1157 = vmatprep.subr.mxu0 0.0
    %1158 = vmatpush2.msra.mxu0 0.0
    %1159 = vmatprep.subr.mxu0 0.0
    %1160 = vmatpush2.msra.mxu0 0.0
    %1161 = vmatprep.subr.mxu0 0.0
    %1162 = vmatpush2.msra.mxu0 0.0
    %1163 = vmatprep.subr.mxu0 0.0
    %1164 = vmatpush2.msra.mxu0 0.0
    %1165 = vmatprep.subr.mxu0 0.0
    %1166 = vmatpush2.msra.mxu0 0.0
    %1167 = vmatprep.subr.mxu0 0.0
    %1168 = vmatpush2.msra.mxu0 0.0
    %1169 = vmatprep.subr.mxu0 0.0
    %1170 = vmatpush2.msra.mxu0 0.0
    %1171 = vmatprep.subr.mxu0 0.0
    %1172 = vmatpush2.msra.mxu0 0.0
    %1173 = vmatprep.subr.mxu0 0.0
    %1174 = vmatpush2.msra.mxu0 0.0
    %1175 = vmatprep.subr.mxu0 0.0
    %1176 = vmatpush2.msra.mxu0 0.0
    %1177 = vmatprep.subr.mxu0 0.0
    %1178 = vmatpush2.msra.mxu0 0.0
    %1179 = vmatprep.mubr.f32.mxu0 0.0
    %1180 = vmatmul.mubr.f32.gmra.mxu0 %v1020
    %v1181 = vpop.f32.mrf.mxu0
    %v1182 = vadd.f32 %v764, %v1181
    %v1183 = vpop.f32.mrf.mxu0
    %v1184 = vadd.f32 %v766, %v1183
    %1185 = vmatprep.mubr.f32.mxu0 0.0
    %1186 = vmatmul.mubr.f32.gmra.mxu0 %v1023
    %v1187 = vpop.f32.mrf.mxu0
    %v1188 = vadd.f32 %v770, %v1187
    %v1189 = vpop.f32.mrf.mxu0
    %v1190 = vadd.f32 %v772, %v1189
    %1191 = vmatprep.mubr.f32.mxu0 0.0
    %1192 = vmatmul.mubr.f32.gmra.mxu0 %v1026
    %v1193 = vpop.f32.mrf.mxu0
    %v1194 = vadd.f32 %v776, %v1193
    %v1195 = vpop.f32.mrf.mxu0
    %v1196 = vadd.f32 %v778, %v1195
    %1197 = vmatprep.mubr.f32.mxu0 0.0
    %1198 = vmatmul.mubr.f32.gmra.mxu0 %v1029
    %v1199 = vpop.f32.mrf.mxu0
    %v1200 = vadd.f32 %v782, %v1199
    %v1201 = vpop.f32.mrf.mxu0
    %v1202 = vadd.f32 %v784, %v1201
    %1203 = vmatprep.mubr.f32.mxu0 0.0
    %1204 = vmatmul.mubr.f32.gmra.mxu0 %v1032
    %v1205 = vpop.f32.mrf.mxu0
    %v1206 = vadd.f32 %v788, %v1205
    %v1207 = vpop.f32.mrf.mxu0
    %v1208 = vadd.f32 %v790, %v1207
    %1209 = vmatprep.mubr.f32.mxu0 0.0
    %1210 = vmatmul.mubr.f32.gmra.mxu0 %v1035
    %v1211 = vpop.f32.mrf.mxu0
    %v1212 = vadd.f32 %v794, %v1211
    %v1213 = vpop.f32.mrf.mxu0
    %v1214 = vadd.f32 %v796, %v1213
    %1215 = vmatprep.mubr.f32.mxu0 0.0
    %1216 = vmatmul.mubr.f32.gmra.mxu0 %v1038
    %v1217 = vpop.f32.mrf.mxu0
    %v1218 = vadd.f32 %v800, %v1217
    %v1219 = vpop.f32.mrf.mxu0
    %v1220 = vadd.f32 %v802, %v1219
    %1221 = vmatprep.mubr.f32.mxu0 0.0
    %1222 = vmatmul.mubr.f32.gmra.mxu0 %v1041
    %v1223 = vpop.f32.mrf.mxu0
    %v1224 = vadd.f32 %v806, %v1223
    %v1225 = vpop.f32.mrf.mxu0
    %v1226 = vadd.f32 %v808, %v1225
    %1227 = vmatprep.mubr.f32.mxu0 0.0
    %1228 = vmatmul.mubr.f32.gmra.mxu0 %v1044
    %v1229 = vpop.f32.mrf.mxu0
    %v1230 = vadd.f32 %v812, %v1229
    %v1231 = vpop.f32.mrf.mxu0
    %v1232 = vadd.f32 %v814, %v1231
    %1233 = vmatprep.mubr.f32.mxu0 0.0
    %1234 = vmatmul.mubr.f32.gmra.mxu0 %v1047
    %v1235 = vpop.f32.mrf.mxu0
    %v1236 = vadd.f32 %v818, %v1235
    %v1237 = vpop.f32.mrf.mxu0
    %v1238 = vadd.f32 %v820, %v1237
    %1239 = vmatprep.mubr.f32.mxu0 0.0
    %1240 = vmatmul.mubr.f32.gmra.mxu0 %v1050
    %v1241 = vpop.f32.mrf.mxu0
    %v1242 = vadd.f32 %v824, %v1241
    %v1243 = vpop.f32.mrf.mxu0
    %v1244 = vadd.f32 %v826, %v1243
    %1245 = vmatprep.mubr.f32.mxu0 0.0
    %1246 = vmatmul.mubr.f32.gmra.mxu0 %v1053
    %v1247 = vpop.f32.mrf.mxu0
    %v1248 = vadd.f32 %v830, %v1247
    %v1249 = vpop.f32.mrf.mxu0
    %v1250 = vadd.f32 %v832, %v1249
    %1251 = vmatprep.mubr.f32.mxu0 0.0
    %1252 = vmatmul.mubr.f32.gmra.mxu0 %v1056
    %v1253 = vpop.f32.mrf.mxu0
    %v1254 = vadd.f32 %v836, %v1253
    %v1255 = vpop.f32.mrf.mxu0
    %v1256 = vadd.f32 %v838, %v1255
    %1257 = vmatprep.mubr.f32.mxu0 0.0
    %1258 = vmatmul.mubr.f32.gmra.mxu0 %v1059
    %v1259 = vpop.f32.mrf.mxu0
    %v1260 = vadd.f32 %v842, %v1259
    %v1261 = vpop.f32.mrf.mxu0
    %v1262 = vadd.f32 %v844, %v1261
    %1263 = vmatprep.mubr.f32.mxu0 0.0
    %1264 = vmatmul.mubr.f32.gmra.mxu0 %v1062
    %v1265 = vpop.f32.mrf.mxu0
    %v1266 = vadd.f32 %v848, %v1265
    %v1267 = vpop.f32.mrf.mxu0
    %v1268 = vadd.f32 %v850, %v1267
    %1269 = vmatprep.mubr.f32.mxu0 0.0
    %1270 = vmatmul.mubr.f32.gmra.mxu0 %v1065
    %v1271 = vpop.f32.mrf.mxu0
    %v1272 = vadd.f32 %v854, %v1271
    %v1273 = vpop.f32.mrf.mxu0
    %v1274 = vadd.f32 %v856, %v1273
    %1275 = vmatprep.mubr.f32.mxu0 0.0
    %1276 = vmatmul.mubr.f32.gmra.mxu0 %v1068
    %v1277 = vpop.f32.mrf.mxu0
    %v1278 = vadd.f32 %v860, %v1277
    %v1279 = vpop.f32.mrf.mxu0
    %v1280 = vadd.f32 %v862, %v1279
    %1281 = vmatprep.mubr.f32.mxu0 0.0
    %1282 = vmatmul.mubr.f32.gmra.mxu0 %v1071
    %v1283 = vpop.f32.mrf.mxu0
    %v1284 = vadd.f32 %v866, %v1283
    %v1285 = vpop.f32.mrf.mxu0
    %v1286 = vadd.f32 %v868, %v1285
    %1287 = vmatprep.mubr.f32.mxu0 0.0
    %1288 = vmatmul.mubr.f32.gmra.mxu0 %v1074
    %v1289 = vpop.f32.mrf.mxu0
    %v1290 = vadd.f32 %v872, %v1289
    %v1291 = vpop.f32.mrf.mxu0
    %v1292 = vadd.f32 %v874, %v1291
    %1293 = vmatprep.mubr.f32.mxu0 0.0
    %1294 = vmatmul.mubr.f32.gmra.mxu0 %v1077
    %v1295 = vpop.f32.mrf.mxu0
    %v1296 = vadd.f32 %v878, %v1295
    %v1297 = vpop.f32.mrf.mxu0
    %v1298 = vadd.f32 %v880, %v1297
    %1299 = vmatprep.mubr.f32.mxu0 0.0
    %1300 = vmatmul.mubr.f32.gmra.mxu0 %v1080
    %v1301 = vpop.f32.mrf.mxu0
    %v1302 = vadd.f32 %v884, %v1301
    %v1303 = vpop.f32.mrf.mxu0
    %v1304 = vadd.f32 %v886, %v1303
    %1305 = vmatprep.mubr.f32.mxu0 0.0
    %1306 = vmatmul.mubr.f32.gmra.mxu0 %v1083
    %v1307 = vpop.f32.mrf.mxu0
    %v1308 = vadd.f32 %v890, %v1307
    %v1309 = vpop.f32.mrf.mxu0
    %v1310 = vadd.f32 %v892, %v1309
    %1311 = vmatprep.mubr.f32.mxu0 0.0
    %1312 = vmatmul.mubr.f32.gmra.mxu0 %v1086
    %v1313 = vpop.f32.mrf.mxu0
    %v1314 = vadd.f32 %v896, %v1313
    %v1315 = vpop.f32.mrf.mxu0
    %v1316 = vadd.f32 %v898, %v1315
    %1317 = vmatprep.mubr.f32.mxu0 0.0
    %1318 = vmatmul.mubr.f32.gmra.mxu0 %v1089
    %v1319 = vpop.f32.mrf.mxu0
    %v1320 = vadd.f32 %v902, %v1319
    %v1321 = vpop.f32.mrf.mxu0
    %v1322 = vadd.f32 %v904, %v1321
    %1323 = vmatprep.mubr.f32.mxu0 0.0
    %1324 = vmatmul.mubr.f32.gmra.mxu0 %v1092
    %v1325 = vpop.f32.mrf.mxu0
    %v1326 = vadd.f32 %v908, %v1325
    %v1327 = vpop.f32.mrf.mxu0
    %v1328 = vadd.f32 %v910, %v1327
    %1329 = vmatprep.mubr.f32.mxu0 0.0
    %1330 = vmatmul.mubr.f32.gmra.mxu0 %v1095
    %v1331 = vpop.f32.mrf.mxu0
    %v1332 = vadd.f32 %v914, %v1331
    %v1333 = vpop.f32.mrf.mxu0
    %v1334 = vadd.f32 %v916, %v1333
    %1335 = vmatprep.mubr.f32.mxu0 0.0
    %1336 = vmatmul.mubr.f32.gmra.mxu0 %v1098
    %v1337 = vpop.f32.mrf.mxu0
    %v1338 = vadd.f32 %v920, %v1337
    %v1339 = vpop.f32.mrf.mxu0
    %v1340 = vadd.f32 %v922, %v1339
    %1341 = vmatprep.mubr.f32.mxu0 0.0
    %1342 = vmatmul.mubr.f32.gmra.mxu0 %v1101
    %v1343 = vpop.f32.mrf.mxu0
    %v1344 = vadd.f32 %v926, %v1343
    %v1345 = vpop.f32.mrf.mxu0
    %v1346 = vadd.f32 %v928, %v1345
    %1347 = vmatprep.mubr.f32.mxu0 0.0
    %1348 = vmatmul.mubr.f32.gmra.mxu0 %v1104
    %v1349 = vpop.f32.mrf.mxu0
    %v1350 = vadd.f32 %v932, %v1349
    %v1351 = vpop.f32.mrf.mxu0
    %v1352 = vadd.f32 %v934, %v1351
    %1353 = vmatprep.mubr.f32.mxu0 0.0
    %1354 = vmatmul.mubr.f32.gmra.mxu0 %v1107
    %v1355 = vpop.f32.mrf.mxu0
    %v1356 = vadd.f32 %v938, %v1355
    %v1357 = vpop.f32.mrf.mxu0
    %v1358 = vadd.f32 %v940, %v1357
    %1359 = vmatprep.mubr.f32.mxu0 0.0
    %1360 = vmatmul.mubr.f32.gmra.mxu0 %v1110
    %v1361 = vpop.f32.mrf.mxu0
    %v1362 = vadd.f32 %v944, %v1361
    %v1363 = vpop.f32.mrf.mxu0
    %v1364 = vadd.f32 %v946, %v1363
    %1365 = vmatprep.mubr.f32.mxu0 0.0
    %1366 = vmatmul.mubr.f32.gmra.mxu0 %v1113
    %v1367 = vpop.f32.mrf.mxu0
    %v1368 = vadd.f32 %v950, %v1367
    %v1369 = vpop.f32.mrf.mxu0
    %v1370 = vadd.f32 %v952, %v1369
    %1371 = vdwg.mxu0
    %1372 = vst [vmem:[#allocation7] sm:$0xff] %v1182
    %1373 = vst [vmem:[#allocation7 + $0x8] sm:$0xff] %v1184
    %1374 = vst [vmem:[#allocation7 + $0x10] sm:$0xff] %v1188
    %1375 = vst [vmem:[#allocation7 + $0x18] sm:$0xff] %v1190
    %1376 = vst [vmem:[#allocation7 + $0x20] sm:$0xff] %v1194
    %1377 = vst [vmem:[#allocation7 + $0x28] sm:$0xff] %v1196
    %1378 = vst [vmem:[#allocation7 + $0x30] sm:$0xff] %v1200
    %1379 = vst [vmem:[#allocation7 + $0x38] sm:$0xff] %v1202
    %1380 = vst [vmem:[#allocation7 + $0x40] sm:$0xff] %v1206
    %1381 = vst [vmem:[#allocation7 + $0x48] sm:$0xff] %v1208
    %1382 = vst [vmem:[#allocation7 + $0x50] sm:$0xff] %v1212
    %1383 = vst [vmem:[#allocation7 + $0x58] sm:$0xff] %v1214
    %1384 = vst [vmem:[#allocation7 + $0x60] sm:$0xff] %v1218
    %1385 = vst [vmem:[#allocation7 + $0x68] sm:$0xff] %v1220
    %1386 = vst [vmem:[#allocation7 + $0x70] sm:$0xff] %v1224
    %1387 = vst [vmem:[#allocation7 + $0x78] sm:$0xff] %v1226
    %1388 = vst [vmem:[#allocation7 + $0x80] sm:$0xff] %v1230
    %1389 = vst [vmem:[#allocation7 + $0x88] sm:$0xff] %v1232
    %1390 = vst [vmem:[#allocation7 + $0x90] sm:$0xff] %v1236
    %1391 = vst [vmem:[#allocation7 + $0x98] sm:$0xff] %v1238
    %1392 = vst [vmem:[#allocation7 + $0xa0] sm:$0xff] %v1242
    %1393 = vst [vmem:[#allocation7 + $0xa8] sm:$0xff] %v1244
    %1394 = vst [vmem:[#allocation7 + $0xb0] sm:$0xff] %v1248
    %1395 = vst [vmem:[#allocation7 + $0xb8] sm:$0xff] %v1250
    %1396 = vst [vmem:[#allocation7 + $0xc0] sm:$0xff] %v1254
    %1397 = vst [vmem:[#allocation7 + $0xc8] sm:$0xff] %v1256
    %1398 = vst [vmem:[#allocation7 + $0xd0] sm:$0xff] %v1260
    %1399 = vst [vmem:[#allocation7 + $0xd8] sm:$0xff] %v1262
    %1400 = vst [vmem:[#allocation7 + $0xe0] sm:$0xff] %v1266
    %1401 = vst [vmem:[#allocation7 + $0xe8] sm:$0xff] %v1268
    %1402 = vst [vmem:[#allocation7 + $0xf0] sm:$0xff] %v1272
    %1403 = vst [vmem:[#allocation7 + $0xf8] sm:$0xff] %v1274
    %1404 = vst [vmem:[#allocation7 + $0x100] sm:$0xff] %v1278
    %1405 = vst [vmem:[#allocation7 + $0x108] sm:$0xff] %v1280
    %1406 = vst [vmem:[#allocation7 + $0x110] sm:$0xff] %v1284
    %1407 = vst [vmem:[#allocation7 + $0x118] sm:$0xff] %v1286
    %1408 = vst [vmem:[#allocation7 + $0x120] sm:$0xff] %v1290
    %1409 = vst [vmem:[#allocation7 + $0x128] sm:$0xff] %v1292
    %1410 = vst [vmem:[#allocation7 + $0x130] sm:$0xff] %v1296
    %1411 = vst [vmem:[#allocation7 + $0x138] sm:$0xff] %v1298
    %1412 = vst [vmem:[#allocation7 + $0x140] sm:$0xff] %v1302
    %1413 = vst [vmem:[#allocation7 + $0x148] sm:$0xff] %v1304
    %1414 = vst [vmem:[#allocation7 + $0x150] sm:$0xff] %v1308
    %1415 = vst [vmem:[#allocation7 + $0x158] sm:$0xff] %v1310
    %1416 = vst [vmem:[#allocation7 + $0x160] sm:$0xff] %v1314
    %1417 = vst [vmem:[#allocation7 + $0x168] sm:$0xff] %v1316
    %1418 = vst [vmem:[#allocation7 + $0x170] sm:$0xff] %v1320
    %1419 = vst [vmem:[#allocation7 + $0x178] sm:$0xff] %v1322
    %1420 = vst [vmem:[#allocation7 + $0x180] sm:$0xff] %v1326
    %1421 = vst [vmem:[#allocation7 + $0x188] sm:$0xff] %v1328
    %1422 = vst [vmem:[#allocation7 + $0x190] sm:$0xff] %v1332
    %1423 = vst [vmem:[#allocation7 + $0x198] sm:$0xff] %v1334
    %1424 = vst [vmem:[#allocation7 + $0x1a0] sm:$0xff] %v1338
    %1425 = vst [vmem:[#allocation7 + $0x1a8] sm:$0xff] %v1340
    %1426 = vst [vmem:[#allocation7 + $0x1b0] sm:$0xff] %v1344
    %1427 = vst [vmem:[#allocation7 + $0x1b8] sm:$0xff] %v1346
    %1428 = vst [vmem:[#allocation7 + $0x1c0] sm:$0xff] %v1350
    %1429 = vst [vmem:[#allocation7 + $0x1c8] sm:$0xff] %v1352
    %1430 = vst [vmem:[#allocation7 + $0x1d0] sm:$0xff] %v1356
    %1431 = vst [vmem:[#allocation7 + $0x1d8] sm:$0xff] %v1358
    %1432 = vst [vmem:[#allocation7 + $0x1e0] sm:$0xff] %v1362
    %1433 = vst [vmem:[#allocation7 + $0x1e8] sm:$0xff] %v1364
    %1434 = vst [vmem:[#allocation7 + $0x1f0] sm:$0xff] %v1368
    %1435 = vst [vmem:[#allocation7 + $0x1f8] sm:$0xff] %v1370
    // Predicated region
    $region18: #{tpu_custom_call.1} parent=1 // pred_check
      _
    $region19: #{tpu_custom_call.1} parent=1 // pred_check_branch
      %1437 = sbr.rel (0) target = $region21
    $region20: #{tpu_custom_call.1} parent=1 // pred_region
      %s1439 = ssub.s32 8192, 8192
      %1440 = vsyncadd [#allocation4], %s1439
      %s1441 = sshll.u32 [#allocation7], 4
      %s1442 = int_to_ptr.vmem [resolvable:$true] %s1441
      %1447 = dma.vmem_to_hbm [thread:$0]  %s1442, 8192, %s2, [#allocation4], 256, 256, 16
    $region21: #{tpu_custom_call.1} parent=1 // pred_fallthru
      _
    // Predicated region
    $region22: #{tpu_custom_call.1} parent=1 // pred_check
      _
    $region23: #{tpu_custom_call.1} parent=1 // pred_check_branch
      %1449 = sbr.rel (0) target = $region25
    $region24: #{tpu_custom_call.1} parent=1 // pred_region
      %1450 = dma.done [#allocation4], 8192
    $region25: #{tpu_custom_call.1} parent=1 // pred_fallthru
      _
    %1451 = vsyncpa [#allocation3], 1
    %1452 = vsyncpa [#allocation6], 1
    %1453 = vsyncpa [#allocation4], 1

</llo_original>
